<compile_context>
chip_gen: v6e
topology: v6e:2x2x1
jax: 0.10.0
libtpu: 0.0.40
codegen_flags: <defaults>
</compile_context>

<pallas_src>
import jax
import jax.numpy as jnp
from jax import lax
from jax.experimental import pallas as pl
from jax.experimental.pallas import tpu as pltpu


def _vmem_capacity_bytes():
    """Physical VMEM of the current chip; conservative fallback if unqueryable."""
    try:
        info = pltpu.get_tpu_info()
        cap = getattr(info, "vmem_capacity_bytes", None)
        if cap:
            return int(cap)
    except Exception:
        pass
    return 64 * 2**20  # safe for v7x / v6e / v5e


def _make_root_kernel(num_children, residual, nb, precision):
    """Kernel body for fixed #children / residual flag / batch block nb."""
    batched = nb > 1

    def kernel(*refs):
        xs = refs[:num_children]                      # (nb, C_i, TS) or (C_i, TS)
        ws = refs[num_children:2 * num_children]      # (C_out, C_i), BN scale folded
        shift = refs[2 * num_children][...]           # (C_out, 1) f32
        o_ref = refs[2 * num_children + 1]            # (nb, C_out, TS) or (C_out, TS)
        w_vals = [w[...] for w in ws]                 # tiny, hoisted out of the loop

        def one(x_tiles):
            acc = jnp.dot(w_vals[0], x_tiles[0],
                          preferred_element_type=jnp.float32, precision=precision)
            for i in range(1, num_children):
                acc = acc + jnp.dot(w_vals[i], x_tiles[i],
                                    preferred_element_type=jnp.float32,
                                    precision=precision)
            y = acc + shift                           # BN shift (scale already in W)
            if residual:
                # children[0] tile is already in VMEM as the first matmul operand.
                y = y + x_tiles[0].astype(jnp.float32)
            return jnp.maximum(y, 0.0)

        if batched:
            for bi in range(nb):                      # static unroll over batch block
                o_ref[bi] = one([x[bi] for x in xs]).astype(o_ref.dtype)
        else:
            o_ref[...] = one([x[...] for x in xs]).astype(o_ref.dtype)

    return kernel


def root_forward(children, weight, gamma, beta, running_mean, running_var,
                 *, residual=True, eps=1e-5, ts=None, matmul_dtype=None,
                 out_dtype=None, precision=lax.Precision.HIGHEST):
    """Root forward.

    children: list of NCHW arrays.
    weight:   (C_out, C_in) or (C_out, C_in, 1, 1) conv weight.
    BN params gamma/beta/running_mean/running_var: (C_out,).
    ts:       optional cap on spatial columns per grid step (default 8192;
              further limited by the chip's VMEM).
    matmul_dtype: optional dtype for the (tiny) weight slices only; for the
              HBM-bandwidth win the activations must already be that dtype.
    out_dtype: output dtype (default = children[0].dtype); bf16 halves writeback.
    precision: MXU precision for the 1x1-conv matmuls (HIGHEST ~ free here).
    """
    num_children = len(children)
    n, c0, h, w = children[0].shape
    weight = weight.reshape(weight.shape[0], -1)
    c_out, c_in = weight.shape
    c_ins = [int(t.shape[1]) for t in children]
    assert sum(c_ins) == c_in, "weight C_in must match total children channels"
    if residual:
        assert c0 == c_out, "residual requires children[0] channels == out_channels"
    # TODO(synk): kernel_size>1 in the PyTorch module only adds padding around a
    # 1x1 conv (a padded-output oddity of the original code); not modeled here.

    hw = h * w
    if out_dtype is None:
        out_dtype = children[0].dtype

    # NCHW -> (N, C, H*W): pure view, no HBM copy.
    xs = [t.reshape(n, t.shape[1], hw) for t in children]

    # Fold inference BatchNorm into the conv: scale -> weight, shift -> bias.
    scale = gamma / jnp.sqrt(running_var + eps)                    # (C_out,)
    shift = (beta - running_mean * scale).reshape(c_out, 1).astype(jnp.float32)
    w_scaled = weight.astype(jnp.float32) * scale[:, None]         # (C_out, C_in)

    # Per-child weight slices (replaces concatenating activations in HBM).
    offs = [0]
    for c in c_ins:
        offs.append(offs[-1] + c)
    ws = [w_scaled[:, offs[i]:offs[i + 1]] for i in range(num_children)]
    if matmul_dtype is not None:
        # Only the tiny weight slices are cast; activations stream as produced.
        ws = [wi.astype(matmul_dtype) for wi in ws]

    # ---------------- generation-aware tiling ----------------
    vmem_cap = _vmem_capacity_bytes()
    budget = (vmem_cap * 3) // 8          # double-buffered streaming working set

    in_col_bytes = sum(c_ins[i] * jnp.dtype(xs[i].dtype).itemsize
                       for i in range(num_children))
    out_col_bytes = c_out * jnp.dtype(out_dtype).itemsize
    col_bytes = in_col_bytes + out_col_bytes

    ts_req = 8192 if ts is None else int(ts)

    # Batch blocking for small H*W stages (per-step overhead dominated).
    nb = 1
    if n > 1 and hw < 1024:
        nb = min(n, max(1, 2048 // max(hw, 1)))
        while n % nb:                      # keep the batch grid exact
            nb -= 1

    ts_vmem = max(128, budget // (2 * max(nb, 1) * col_bytes))
    ts_cap = max(128, (min(ts_req, ts_vmem) // 128) * 128)

    num_tiles = 1 if hw <= ts_cap else pl.cdiv(hw, ts_cap)

    # Megacore (v7x has 2 TCs): ensure >= 2 grid steps whenever the shape allows.
    if (n // nb) * num_tiles < 2:
        if n >= 2:
            nb = max(1, n // 2)
            while n % nb:
                nb -= 1
        elif hw >= 256:
            num_tiles = 2

    # Balanced, lane-dense spatial tile (avoids a tiny ragged last tile).
    if num_tiles == 1:
        ts_eff = hw                        # whole row == full array dim -> legal
    else:
        ts_eff = 128 * pl.cdiv(hw, 128 * num_tiles)
        num_tiles = pl.cdiv(hw, ts_eff)
        # Partial last tile (if any): garbage columns flow through the matmul and
        # are dropped by the masked store; no spatial columns are ever mixed.

    grid = (n // nb, num_tiles)
    batched = nb > 1

    if batched:
        x_specs = [pl.BlockSpec((nb, c_ins[i], ts_eff), lambda b, s: (b, 0, s))
                   for i in range(num_children)]
        out_spec = pl.BlockSpec((nb, c_out, ts_eff), lambda b, s: (b, 0, s))
    else:
        x_specs = [pl.BlockSpec((None, c_ins[i], ts_eff), lambda b, s: (b, 0, s))
                   for i in range(num_children)]
        out_spec = pl.BlockSpec((None, c_out, ts_eff), lambda b, s: (b, 0, s))
    w_specs = [pl.BlockSpec((c_out, c_ins[i]), lambda b, s: (0, 0))
               for i in range(num_children)]
    shift_spec = pl.BlockSpec((c_out, 1), lambda b, s: (0, 0))

    out = pl.pallas_call(
        _make_root_kernel(num_children, residual, nb if batched else 1, precision),
        out_shape=jax.ShapeDtypeStruct((n, c_out, hw), out_dtype),
        grid=grid,
        in_specs=x_specs + w_specs + [shift_spec],
        out_specs=out_spec,
        compiler_params=pltpu.CompilerParams(
            dimension_semantics=("parallel", "parallel"),
            vmem_limit_bytes=int(vmem_cap // 2)),
    )(*xs, *ws, shift)

    return out.reshape(n, c_out, h, w)     # free view back to NCHW


def _reference(children, weight, gamma, beta, mean, var, residual, eps=1e-5):
    x = jnp.concatenate(children, axis=1)                       # (N, C_in, H, W)
    y = jnp.einsum("nchw,oc->nohw", x, weight,
                   precision=lax.Precision.HIGHEST)             # 1x1 conv, no bias
    s = (gamma / jnp.sqrt(var + eps))[None, :, None, None]
    b = (beta - mean * gamma / jnp.sqrt(var + eps))[None, :, None, None]
    y = y * s + b
    if residual:
        y = y + children[0]
    return jnp.maximum(y, 0.0)


def _run_case(key, n, child_channels, c_out, h, w, residual):
    keys = jax.random.split(key, len(child_channels) + 5)
    children = [jax.random.normal(keys[i], (n, c, h, w), dtype=jnp.float32)
                for i, c in enumerate(child_channels)]
    c_in = sum(child_channels)
    kw = keys[len(child_channels):]
    weight = jax.random.normal(kw[0], (c_out, c_in), dtype=jnp.float32) * 0.1
    gamma = 1.0 + 0.1 * jax.random.normal(kw[1], (c_out,), dtype=jnp.float32)
    beta = 0.1 * jax.random.normal(kw[2], (c_out,), dtype=jnp.float32)
    mean = 0.1 * jax.random.normal(kw[3], (c_out,), dtype=jnp.float32)
    var = jnp.abs(jax.random.normal(kw[4], (c_out,), dtype=jnp.float32)) + 0.5

    out = root_forward(children, weight, gamma, beta, mean, var,
                       residual=residual)
    out = jax.block_until_ready(out)
    ref = _reference(children, weight, gamma, beta, mean, var, residual)
    assert out.shape == (n, c_out, h, w)
    err = float(jnp.max(jnp.abs(out - ref)))
    assert jnp.allclose(out, ref, atol=1e-3, rtol=1e-3), f"mismatch: {err}"


if __name__ == "__main__":
    key = jax.random.PRNGKey(0)
    k1, k2, k3, k4 = jax.random.split(key, 4)

    # Two 32-channel children, 16x16 spatial -> per-image grid steps (megacore).
    _run_case(k1, n=2, child_channels=[32, 32], c_out=32, h=16, w=16, residual=True)
    _run_case(k2, n=2, child_channels=[32, 32], c_out=32, h=16, w=16, residual=False)

    # Small H*W, more batch -> batch-blocked path (several images per grid step).
    _run_case(k3, n=4, child_channels=[16, 16, 16], c_out=16, h=14, w=14, residual=True)

    # Single image, larger H*W -> spatial tiling path (>= 2 lane-dense tiles).
    _run_case(k4, n=1, child_channels=[32, 32], c_out=32, h=32, w=32, residual=False)

    print("KERNEL_OK")
</pallas_src>

<mosaic_0001>
module attributes {stable_mosaic.version = 11 : i64} {
  func.func @kernel(%arg0: i32, %arg1: i32, %arg2: memref<1x32x256xf32, #tpu.memory_space<vmem>>, %arg3: memref<1x32x256xf32, #tpu.memory_space<vmem>>, %arg4: memref<32x32xf32, #tpu.memory_space<vmem>>, %arg5: memref<32x32xf32, #tpu.memory_space<vmem>>, %arg6: memref<32x1xf32, #tpu.memory_space<vmem>>, %arg7: memref<1x32x256xf32, #tpu.memory_space<vmem>>) attributes {dimension_semantics = [#tpu.dimension_semantics<parallel>, #tpu.dimension_semantics<parallel>], iteration_bounds = array<i64: 2, 1>, scalar_prefetch = 0 : i64, scratch_operands = 0 : i64, tpu.core_type = #tpu.core_type<tc>, window_params = [{transform_indices = @transform_0, window_bounds = array<i64: 1, 32, 256>}, {transform_indices = @transform_1, window_bounds = array<i64: 1, 32, 256>}, {pipeline_mode = #tpu.pipeline_mode<synchronous>, transform_indices = @transform_2, window_bounds = array<i64: 32, 32>}, {pipeline_mode = #tpu.pipeline_mode<synchronous>, transform_indices = @transform_3, window_bounds = array<i64: 32, 32>}, {pipeline_mode = #tpu.pipeline_mode<synchronous>, transform_indices = @transform_4, window_bounds = array<i64: 32, 1>}, {transform_indices = @transform_5, window_bounds = array<i64: 1, 32, 256>}]} {
    %c0 = arith.constant 0 : index
    %c0_0 = arith.constant 0 : index
    %0 = vector.load %arg6[%c0, %c0_0] : memref<32x1xf32, #tpu.memory_space<vmem>>, vector<32x1xf32>
    %c0_1 = arith.constant 0 : index
    %c0_2 = arith.constant 0 : index
    %1 = vector.load %arg4[%c0_1, %c0_2] : memref<32x32xf32, #tpu.memory_space<vmem>>, vector<32x32xf32>
    %c0_3 = arith.constant 0 : index
    %c0_4 = arith.constant 0 : index
    %2 = vector.load %arg5[%c0_3, %c0_4] : memref<32x32xf32, #tpu.memory_space<vmem>>, vector<32x32xf32>
    %c0_5 = arith.constant 0 : index
    %c0_6 = arith.constant 0 : index
    %c0_7 = arith.constant 0 : index
    %3 = vector.load %arg2[%c0_5, %c0_6, %c0_7] : memref<1x32x256xf32, #tpu.memory_space<vmem>>, vector<1x32x256xf32>
    %4 = vector.shape_cast %3 : vector<1x32x256xf32> to vector<32x256xf32>
    %c0_8 = arith.constant 0 : index
    %c0_9 = arith.constant 0 : index
    %c0_10 = arith.constant 0 : index
    %5 = vector.load %arg3[%c0_8, %c0_9, %c0_10] : memref<1x32x256xf32, #tpu.memory_space<vmem>>, vector<1x32x256xf32>
    %6 = vector.shape_cast %5 : vector<1x32x256xf32> to vector<32x256xf32>
    %cst = arith.constant dense<0.000000e+00> : vector<32x256xf32>
    %7 = tpu.matmul %1, %4, %cst {dimension_numbers = #tpu.dot_dimension_numbers<[1], [0], [0], [1], [0, 0, 1, 1], [], []>, precision = #tpu.contract_precision<fp32>} : vector<32x32xf32>, vector<32x256xf32>, vector<32x256xf32> -> vector<32x256xf32>
    %cst_11 = arith.constant dense<0.000000e+00> : vector<32x256xf32>
    %8 = tpu.matmul %2, %6, %cst_11 {dimension_numbers = #tpu.dot_dimension_numbers<[1], [0], [0], [1], [0, 0, 1, 1], [], []>, precision = #tpu.contract_precision<fp32>} : vector<32x32xf32>, vector<32x256xf32>, vector<32x256xf32> -> vector<32x256xf32>
    %9 = arith.addf %7, %8 : vector<32x256xf32>
    %10 = vector.broadcast %0 : vector<32x1xf32> to vector<32x256xf32>
    %11 = arith.addf %9, %10 : vector<32x256xf32>
    %12 = arith.addf %11, %4 : vector<32x256xf32>
    %cst_12 = arith.constant 0.000000e+00 : f32
    %13 = vector.broadcast %cst_12 : f32 to vector<32x256xf32>
    %14 = arith.maximumf %12, %13 : vector<32x256xf32>
    %c0_13 = arith.constant 0 : index
    %c0_14 = arith.constant 0 : index
    %c0_15 = arith.constant 0 : index
    %15 = vector.load %arg7[%c0_13, %c0_14, %c0_15] : memref<1x32x256xf32, #tpu.memory_space<vmem>>, vector<1x32x256xf32>
    %16 = vector.shape_cast %15 : vector<1x32x256xf32> to vector<32x256xf32>
    %17 = vector.shape_cast %14 : vector<32x256xf32> to vector<1x32x256xf32>
    tpu.vector_store %arg7[%c0_13, %c0_14, %c0_15], %17 {strides = array<i32>} : memref<1x32x256xf32, #tpu.memory_space<vmem>>, vector<1x32x256xf32>,
    return
  }
  func.func @transform_0(%arg0: i32, %arg1: i32) -> (i32, i32, i32) {
    %c0_i32 = arith.constant 0 : i32
    %c0_i32_0 = arith.constant 0 : i32
    return %arg0, %c0_i32, %arg1 : i32, i32, i32
  }
  func.func @transform_1(%arg0: i32, %arg1: i32) -> (i32, i32, i32) {
    %c0_i32 = arith.constant 0 : i32
    %c0_i32_0 = arith.constant 0 : i32
    return %arg0, %c0_i32, %arg1 : i32, i32, i32
  }
  func.func @transform_2(%arg0: i32, %arg1: i32) -> (i32, i32) {
    %c0_i32 = arith.constant 0 : i32
    %c0_i32_0 = arith.constant 0 : i32
    %c0_i32_1 = arith.constant 0 : i32
    return %c0_i32, %c0_i32_0 : i32, i32
  }
  func.func @transform_3(%arg0: i32, %arg1: i32) -> (i32, i32) {
    %c0_i32 = arith.constant 0 : i32
    %c0_i32_0 = arith.constant 0 : i32
    %c0_i32_1 = arith.constant 0 : i32
    return %c0_i32, %c0_i32_0 : i32, i32
  }
  func.func @transform_4(%arg0: i32, %arg1: i32) -> (i32, i32) {
    %c0_i32 = arith.constant 0 : i32
    %c0_i32_0 = arith.constant 0 : i32
    %c0_i32_1 = arith.constant 0 : i32
    return %c0_i32, %c0_i32_0 : i32, i32
  }
  func.func @transform_5(%arg0: i32, %arg1: i32) -> (i32, i32, i32) {
    %c0_i32 = arith.constant 0 : i32
    %c0_i32_0 = arith.constant 0 : i32
    return %arg0, %c0_i32, %arg1 : i32, i32, i32
  }
}

</mosaic_0001>

<llo_original>
// kernel: tpu_custom_call.1
$region0: #{tpu_custom_call.1}
  #allocation0 [shape = 'u32[]', space=smem, size = 0x4, offset = 0x4, fixed_abs, tag = 'smem constant byte address 0x4 - core index']
  #allocation1 [shape = 'u32[144,128]{1,0:T(1,128)}', space=vmem, size = 0x12000, scoped, tag = 'internal scratch']
  %s0 = inlined_call_operand.hbm [shape: f32[2,32,256], index: 0, kind: input, shape index: {}]
  %s1 = inlined_call_operand.hbm [shape: f32[2,32,256], index: 1, kind: input, shape index: {}]
  %s2 = inlined_call_operand.vmem [shape: f32[32,32], index: 2, kind: input, shape index: {}]
  %s3 = inlined_call_operand.hbm [shape: f32[32,32], index: 3, kind: input, shape index: {}]
  %s4 = inlined_call_operand.vmem [shape: f32[32,1], index: 4, kind: input, shape index: {}]
  %s5 = inlined_call_operand.hbm [shape: f32[2,32,256], index: 5, kind: output, shape index: {}]
  %s6 = sld [smem:[#allocation0]]
  $region65: #{tpu_custom_call.1} parent=0
    _
  %s8 = ssub.s32 1, %s6
  %s9 = scalar_select 0, %s8, %s6
  $region1: #{tpu_custom_call.1} parent=0
    #allocation2 [shape = 'u8[65536]{0}', space=vmem, size = 0x10000, scoped, tag = 'input window, operand 0']
    #allocation3 [shape = 's32[2]{0}', space=sflag, size = 0x8, scoped, tag = 'scoped memory for tpu_custom_call.1']
    #allocation4 [shape = 's32[2]{0}', space=sflag, size = 0x8, scoped, tag = 'scoped memory for tpu_custom_call.1']
    #allocation5 [shape = 'u8[65536]{0}', space=vmem, size = 0x10000, scoped, tag = 'input window, operand 1']
    #allocation6 [shape = 's32[2]{0}', space=sflag, size = 0x8, scoped, tag = 'scoped memory for tpu_custom_call.1']
    #allocation7 [shape = 'u8[16384]{0}', space=vmem, size = 0x4000, scoped, tag = 'input window, operand 3, single buffered']
    #allocation8 [shape = 'u8[65536]{0}', space=vmem, size = 0x10000, scoped, tag = 'output window, operand 0']
    %10 = vsyncpa [#allocation3], 0
    %s11 = scalar_lea.sflag [#allocation3], 1
    %12 = vsyncpa %s11, 0
    %13 = vsyncpa [#allocation6], 0
    %s14 = scalar_lea.sflag [#allocation6], 1
    %15 = vsyncpa %s14, 0
    %16 = vsyncpa [#allocation4], 0
    %s17 = scalar_lea.sflag [#allocation4], 1
    %18 = vsyncpa %s17, 0
    loop: start=0, step=1, limit=4
    $region2: #{tpu_custom_call.1} parent=1 // loop_pre_header
      _
    $region3: #{tpu_custom_call.1} parent=1 // loop_header
      %s20 = sphi 0, %s24
      %p21 = scmp.ge.s32.totalorder %s20, 4
      %s27 = sphi 0, %s39
      %s28 = sphi 0, %s35
      %s29 = sphi 0, %s27
      %s30 = sphi 0, %s28
      %s31 = sphi 0, %s29
      %s32 = sphi 0, %s30
      %s44 = sphi 0, %s46
      %s47 = sphi 0, %s44
      %s48 = sphi 0, %s47
      %s64 = sphi 0, %s48
      %s72 = sphi 0, %s74
      %s75 = sphi 0, %s72
      %s76 = sphi 0, %s75
      %s92 = sphi 0, %s76
      %s96 = sphi 0, %s96
      %s98 = sphi 0, %s96
      %s99 = sphi 0, %s98
      %s113 = sphi 0, %s99
      %s117 = sphi 0, %s117
      %s119 = sphi 0, %s117
      %s120 = sphi 0, %s119
      %s134 = sphi 0, %s120
      %s138 = sphi 0, %s138
      %s140 = sphi 0, %s138
      %s141 = sphi 0, %s140
      %s155 = sphi 0, %s141
      %s163 = sphi 0, %s165
      %s166 = sphi 0, %s163
      %s167 = sphi 0, %s166
      %s183 = sphi 0, %s167
    $region4: #{tpu_custom_call.1} parent=1 // loop_header_branch
      %23 = sbr.rel (%p21) target = $region8
    $region5: #{tpu_custom_call.1} parent=1 // loop_body
      %s25 = ssub.s32 %s20, 1
      %s26 = ssub.s32 %s20, 2
      %s33 = sadd.s32 1, %s28
      %p34 = scmp.ge.s32.totalorder %s33, 1
      %s35 = scalar_select %p34, 0, %s33
      %s36 = sadd.s32 1, %s27
      %s37 = scalar_select %p34, %s36, %s27
      %p38 = scmp.ge.s32.totalorder %s37, 2
      %s39 = scalar_select %p38, 0, %s37
      %s40 = ssub.s32 %s27, %s39
      %s41 = ssub.s32 %s28, %s35
      %s42 = sor.u32 %s40, %s41
      %p43 = scmp.eq.s32.totalorder %s42, 0
      %s45 = sadd.s32 %s44, 1
      %s46 = scalar_select %p43, %s44, %s45
      %p49 = pneg %p43
      %p50 = scmp.eq.s32.totalorder %s20, 1
      %p51 = por %p49, %p50
      %p52 = scmp.ne.s32.totalorder %s44, %s47
      %p53 = scmp.eq.s32.totalorder %s20, 0
      %p54 = por %p52, %p53
      %p55 = scmp.ne.s32.totalorder %s44, %s47
      %p56 = scmp.eq.s32.totalorder %s25, 1
      %p57 = por %p55, %p56
      %p58 = scmp.ne.s32.totalorder %s47, %s48
      %p59 = scmp.eq.s32.totalorder %s25, 0
      %p60 = por %p58, %p59
      %p61 = scmp.ne.s32.totalorder %s47, %s48
      %p62 = scmp.eq.s32.totalorder %s26, 1
      %p63 = por %p61, %p62
      %p65 = scmp.ne.s32.totalorder %s48, %s64
      %p66 = scmp.eq.s32.totalorder %s26, 0
      %p67 = por %p65, %p66
      %s68 = ssub.s32 %s27, %s39
      %s69 = ssub.s32 %s28, %s35
      %s70 = sor.u32 %s68, %s69
      %p71 = scmp.eq.s32.totalorder %s70, 0
      %s73 = sadd.s32 %s72, 1
      %s74 = scalar_select %p71, %s72, %s73
      %p77 = pneg %p71
      %p78 = scmp.eq.s32.totalorder %s20, 1
      %p79 = por %p77, %p78
      %p80 = scmp.ne.s32.totalorder %s72, %s75
      %p81 = scmp.eq.s32.totalorder %s20, 0
      %p82 = por %p80, %p81
      %p83 = scmp.ne.s32.totalorder %s72, %s75
      %p84 = scmp.eq.s32.totalorder %s25, 1
      %p85 = por %p83, %p84
      %p86 = scmp.ne.s32.totalorder %s75, %s76
      %p87 = scmp.eq.s32.totalorder %s25, 0
      %p88 = por %p86, %p87
      %p89 = scmp.ne.s32.totalorder %s75, %s76
      %p90 = scmp.eq.s32.totalorder %s26, 1
      %p91 = por %p89, %p90
      %p93 = scmp.ne.s32.totalorder %s76, %s92
      %p94 = scmp.eq.s32.totalorder %s26, 0
      %p95 = por %p93, %p94
      %s97 = sadd.s32 %s96, 1
      %p100 = scmp.eq.s32.totalorder %s20, 1
      %p101 = scmp.ne.s32.totalorder %s96, %s98
      %p102 = scmp.eq.s32.totalorder %s20, 0
      %p103 = por %p101, %p102
      %p104 = scmp.ne.s32.totalorder %s96, %s98
      %p105 = scmp.eq.s32.totalorder %s25, 1
      %p106 = por %p104, %p105
      %p107 = scmp.ne.s32.totalorder %s98, %s99
      %p108 = scmp.eq.s32.totalorder %s25, 0
      %p109 = por %p107, %p108
      %p110 = scmp.ne.s32.totalorder %s98, %s99
      %p111 = scmp.eq.s32.totalorder %s26, 1
      %p112 = por %p110, %p111
      %p114 = scmp.ne.s32.totalorder %s99, %s113
      %p115 = scmp.eq.s32.totalorder %s26, 0
      %p116 = por %p114, %p115
      %s118 = sadd.s32 %s117, 1
      %p121 = scmp.eq.s32.totalorder %s20, 1
      %p122 = scmp.ne.s32.totalorder %s117, %s119
      %p123 = scmp.eq.s32.totalorder %s20, 0
      %p124 = por %p122, %p123
      %p125 = scmp.ne.s32.totalorder %s117, %s119
      %p126 = scmp.eq.s32.totalorder %s25, 1
      %p127 = por %p125, %p126
      %p128 = scmp.ne.s32.totalorder %s119, %s120
      %p129 = scmp.eq.s32.totalorder %s25, 0
      %p130 = por %p128, %p129
      %p131 = scmp.ne.s32.totalorder %s119, %s120
      %p132 = scmp.eq.s32.totalorder %s26, 1
      %p133 = por %p131, %p132
      %p135 = scmp.ne.s32.totalorder %s120, %s134
      %p136 = scmp.eq.s32.totalorder %s26, 0
      %p137 = por %p135, %p136
      %s139 = sadd.s32 %s138, 1
      %p142 = scmp.eq.s32.totalorder %s20, 1
      %p143 = scmp.ne.s32.totalorder %s138, %s140
      %p144 = scmp.eq.s32.totalorder %s20, 0
      %p145 = por %p143, %p144
      %p146 = scmp.ne.s32.totalorder %s138, %s140
      %p147 = scmp.eq.s32.totalorder %s25, 1
      %p148 = por %p146, %p147
      %p149 = scmp.ne.s32.totalorder %s140, %s141
      %p150 = scmp.eq.s32.totalorder %s25, 0
      %p151 = por %p149, %p150
      %p152 = scmp.ne.s32.totalorder %s140, %s141
      %p153 = scmp.eq.s32.totalorder %s26, 1
      %p154 = por %p152, %p153
      %p156 = scmp.ne.s32.totalorder %s141, %s155
      %p157 = scmp.eq.s32.totalorder %s26, 0
      %p158 = por %p156, %p157
      %s159 = ssub.s32 %s27, %s39
      %s160 = ssub.s32 %s28, %s35
      %s161 = sor.u32 %s159, %s160
      %p162 = scmp.eq.s32.totalorder %s161, 0
      %s164 = sadd.s32 %s163, 1
      %s165 = scalar_select %p162, %s163, %s164
      %p168 = pneg %p162
      %p169 = scmp.eq.s32.totalorder %s20, 1
      %p170 = por %p168, %p169
      %p171 = scmp.ne.s32.totalorder %s163, %s166
      %p172 = scmp.eq.s32.totalorder %s20, 0
      %p173 = por %p171, %p172
      %p174 = scmp.ne.s32.totalorder %s163, %s166
      %p175 = scmp.eq.s32.totalorder %s25, 1
      %p176 = por %p174, %p175
      %p177 = scmp.ne.s32.totalorder %s166, %s167
      %p178 = scmp.eq.s32.totalorder %s25, 0
      %p179 = por %p177, %p178
      %p180 = scmp.ne.s32.totalorder %s166, %s167
      %p181 = scmp.eq.s32.totalorder %s26, 1
      %p182 = por %p180, %p181
      %p184 = scmp.ne.s32.totalorder %s167, %s183
      %p185 = scmp.eq.s32.totalorder %s26, 0
      %p186 = por %p184, %p185
      %p187 = scmp.le.s32.totalorder 1, %s20
      %p188 = scmp.lt.s32.totalorder %s20, 3
      %p189 = pnand %p187, %p188
      %p190 = pneg %p189
      // Predicated region
      $region9: #{tpu_custom_call.1} parent=5 // pred_check
        _
      $region10: #{tpu_custom_call.1} parent=5 // pred_check_branch
        %192 = sbr.rel (%p189) target = $region12
      $region11: #{tpu_custom_call.1} parent=5 // pred_region
        %s193 = ssub.s32 %s20, 1
        // Predicated region
        $region13: #{tpu_custom_call.1} parent=11 // pred_check
          %p194 = pneg %p109
        $region14: #{tpu_custom_call.1} parent=11 // pred_check_branch
          %196 = sbr.rel (%p194) target = $region16
        $region15: #{tpu_custom_call.1} parent=11 // pred_region
          _
        $region16: #{tpu_custom_call.1} parent=11 // pred_fallthru
          _
        // Predicated region
        $region17: #{tpu_custom_call.1} parent=11 // pred_check
          %p197 = pneg %p130
        $region18: #{tpu_custom_call.1} parent=11 // pred_check_branch
          %199 = sbr.rel (%p197) target = $region20
        $region19: #{tpu_custom_call.1} parent=11 // pred_region
          %s201 = ssub.s32 512, 512
          %202 = vsyncadd [#allocation6], %s201
          %s203 = sshll.u32 [#allocation7], 4
          %s204 = int_to_ptr.vmem [resolvable:$true] %s203
          %209 = dma.hbm_to_vmem [thread:$0]  %s3, 512, %s204, [#allocation6], 128, 128, 8
        $region20: #{tpu_custom_call.1} parent=11 // pred_fallthru
          _
        // Predicated region
        $region21: #{tpu_custom_call.1} parent=11 // pred_check
          %p210 = pneg %p151
        $region22: #{tpu_custom_call.1} parent=11 // pred_check_branch
          %212 = sbr.rel (%p210) target = $region24
        $region23: #{tpu_custom_call.1} parent=11 // pred_region
          _
        $region24: #{tpu_custom_call.1} parent=11 // pred_fallthru
          _
      $region12: #{tpu_custom_call.1} parent=5 // pred_fallthru
        _
      %p213 = scmp.lt.s32.totalorder %s20, 2
      // Predicated region
      $region25: #{tpu_custom_call.1} parent=5 // pred_check
        %p214 = pneg %p213
      $region26: #{tpu_custom_call.1} parent=5 // pred_check_branch
        %216 = sbr.rel (%p214) target = $region28
      $region27: #{tpu_custom_call.1} parent=5 // pred_region
        // Predicated region
        $region29: #{tpu_custom_call.1} parent=27 // pred_check
          %p217 = pneg %p54
        $region30: #{tpu_custom_call.1} parent=27 // pred_check_branch
          %219 = sbr.rel (%p217) target = $region32
        $region31: #{tpu_custom_call.1} parent=27 // pred_region
          %s220 = sand.u32 %s44, 1
          %s221 = scalar_lea.sflag [#allocation3], %s220
          %s222 = sand.u32 %s44, 1
          %s223 = smul.addr %s222, 64
          %s224 = scalar_lea.vmem [#allocation2], %s223
          %s225 = smul.u32 2, %s28
          %s227 = ssub.s32 1024, 1024
          %228 = vsyncadd %s221, %s227
          %s229 = smul.addr %s27, 8
          %s230 = sadd.s32 %s225, %s229
          %s231 = smul.addr %s230, 128
          %s232 = scalar_lea.hbm %s0, %s231
          %s233 = sshll.u32 %s224, 4
          %s234 = int_to_ptr.vmem [resolvable:$true] %s233
          %239 = dma.hbm_to_vmem [thread:$0]  %s232, 1024, %s234, %s221, 256, 256, 16
        $region32: #{tpu_custom_call.1} parent=27 // pred_fallthru
          _
        // Predicated region
        $region33: #{tpu_custom_call.1} parent=27 // pred_check
          %p240 = pneg %p82
        $region34: #{tpu_custom_call.1} parent=27 // pred_check_branch
          %242 = sbr.rel (%p240) target = $region36
        $region35: #{tpu_custom_call.1} parent=27 // pred_region
          %s243 = sand.u32 %s20, 1
          %s244 = scalar_lea.sflag [#allocation6], %s243
          %s245 = sand.u32 %s72, 1
          %s246 = smul.addr %s245, 64
          %s247 = scalar_lea.vmem [#allocation5], %s246
          %s248 = smul.u32 2, %s28
          %s250 = ssub.s32 1024, 1024
          %251 = vsyncadd %s244, %s250
          %s252 = smul.addr %s27, 8
          %s253 = sadd.s32 %s248, %s252
          %s254 = smul.addr %s253, 128
          %s255 = scalar_lea.hbm %s1, %s254
          %s256 = sshll.u32 %s247, 4
          %s257 = int_to_ptr.vmem [resolvable:$true] %s256
          %262 = dma.hbm_to_vmem [thread:$0]  %s255, 1024, %s257, %s244, 256, 256, 16
        $region36: #{tpu_custom_call.1} parent=27 // pred_fallthru
          _
      $region28: #{tpu_custom_call.1} parent=5 // pred_fallthru
        _
      %p263 = scmp.le.s32.totalorder 1, %s20
      %p264 = scmp.lt.s32.totalorder %s20, 3
      %p265 = pnand %p263, %p264
      %p266 = pneg %p265
      // Predicated region
      $region37: #{tpu_custom_call.1} parent=5 // pred_check
        _
      $region38: #{tpu_custom_call.1} parent=5 // pred_check_branch
        %268 = sbr.rel (%p265) target = $region40
      $region39: #{tpu_custom_call.1} parent=5 // pred_region
        %s269 = ssub.s32 %s20, 1
        %s270 = sand.u32 %s47, 1
        %s271 = scalar_lea.sflag [#allocation3], %s270
        %s272 = sand.u32 %s47, 1
        %s273 = smul.addr %s272, 64
        %s274 = scalar_lea.vmem [#allocation2], %s273
        // Predicated region
        $region41: #{tpu_custom_call.1} parent=39 // pred_check
          %p275 = pneg %p60
        $region42: #{tpu_custom_call.1} parent=39 // pred_check_branch
          %277 = sbr.rel (%p275) target = $region44
        $region43: #{tpu_custom_call.1} parent=39 // pred_region
          %278 = dma.done %s271, 1024
        $region44: #{tpu_custom_call.1} parent=39 // pred_fallthru
          _
        %s279 = sand.u32 %s25, 1
        %s280 = scalar_lea.sflag [#allocation6], %s279
        %s281 = sand.u32 %s75, 1
        %s282 = smul.addr %s281, 64
        %s283 = scalar_lea.vmem [#allocation5], %s282
        // Predicated region
        $region45: #{tpu_custom_call.1} parent=39 // pred_check
          %p284 = pneg %p88
        $region46: #{tpu_custom_call.1} parent=39 // pred_check_branch
          %286 = sbr.rel (%p284) target = $region48
        $region47: #{tpu_custom_call.1} parent=39 // pred_region
          %287 = dma.done %s280, 1024
        $region48: #{tpu_custom_call.1} parent=39 // pred_fallthru
          _
        // Predicated region
        $region49: #{tpu_custom_call.1} parent=39 // pred_check
          %p288 = pneg %p130
        $region50: #{tpu_custom_call.1} parent=39 // pred_check_branch
          %290 = sbr.rel (%p288) target = $region52
        $region51: #{tpu_custom_call.1} parent=39 // pred_region
          %291 = dma.done [#allocation6], 512
        $region52: #{tpu_custom_call.1} parent=39 // pred_fallthru
          _
        %s292 = sand.u32 %s47, 1
        %s293 = scalar_lea.sflag [#allocation3], %s292
        %s294 = sand.u32 %s47, 1
        %s295 = smul.addr %s294, 64
        %s296 = scalar_lea.vmem [#allocation2], %s295
        %p297 = pneg %p60
        %p298 = pneg %p57
        %s299 = sand.u32 %s25, 1
        %s300 = scalar_lea.sflag [#allocation6], %s299
        %s301 = sand.u32 %s75, 1
        %s302 = smul.addr %s301, 64
        %s303 = scalar_lea.vmem [#allocation5], %s302
        %p304 = pneg %p88
        %p305 = pneg %p85
        %p306 = pneg %p109
        %p307 = pneg %p106
        %p308 = pneg %p130
        %p309 = pneg %p127
        %p310 = pneg %p151
        %p311 = pneg %p148
        %p312 = pneg %p179
        %p313 = pneg %p176
        %s314 = sand.u32 %s166, 1
        %s315 = scalar_lea.sflag [#allocation4], %s314
        %s316 = sand.u32 %s166, 1
        %s317 = smul.addr %s316, 64
        %s318 = scalar_lea.vmem [#allocation8], %s317
        %s319 = smul.u32 2, %s30
        %s320 = smul.u32 2, %s30
        %s321 = smul.u32 2, %s30
        %v322 = vld [vmem:[%s4] sm:$0xff]
        %v323 = vld [vmem:[%s4 + $0x8] sm:$0xff]
        %v324 = vld [vmem:[%s4 + $0x10] sm:$0xff]
        %v325 = vld [vmem:[%s4 + $0x18] sm:$0xff]
        %v326 = vld [vmem:[%s2] sm:$0xff]
        %v327 = vld [vmem:[%s2 + $0x8] sm:$0xff]
        %v328 = vld [vmem:[%s2 + $0x10] sm:$0xff]
        %v329 = vld [vmem:[%s2 + $0x18] sm:$0xff]
        %v330 = vld [vmem:[#allocation7] sm:$0xff]
        %v331 = vld [vmem:[#allocation7 + $0x8] sm:$0xff]
        %v332 = vld [vmem:[#allocation7 + $0x10] sm:$0xff]
        %v333 = vld [vmem:[#allocation7 + $0x18] sm:$0xff]
        %v334 = vld [vmem:[%s274] sm:$0xff]
        %v335 = vld [vmem:[%s274 + $0x8] sm:$0xff]
        %v336 = vld [vmem:[%s274 + $0x10] sm:$0xff]
        %v337 = vld [vmem:[%s274 + $0x18] sm:$0xff]
        %v338 = vld [vmem:[%s274 + $0x20] sm:$0xff]
        %v339 = vld [vmem:[%s274 + $0x28] sm:$0xff]
        %v340 = vld [vmem:[%s274 + $0x30] sm:$0xff]
        %v341 = vld [vmem:[%s274 + $0x38] sm:$0xff]
        %v342 = vld [vmem:[%s283] sm:$0xff]
        %v343 = vld [vmem:[%s283 + $0x8] sm:$0xff]
        %v344 = vld [vmem:[%s283 + $0x10] sm:$0xff]
        %v345 = vld [vmem:[%s283 + $0x18] sm:$0xff]
        %v346 = vld [vmem:[%s283 + $0x20] sm:$0xff]
        %v347 = vld [vmem:[%s283 + $0x28] sm:$0xff]
        %v348 = vld [vmem:[%s283 + $0x30] sm:$0xff]
        %v349 = vld [vmem:[%s283 + $0x38] sm:$0xff]
        %vm350 = vcmask 261120
        %v352 = vsel %vm350, %v330, 0
        %v355 = vsel %vm350, %v331, 0
        %v358 = vsel %vm350, %v332, 0
        %v361 = vsel %vm350, %v333, 0
        %363 = vmatprep.subr.mxu0 0.0
        %364 = vmatpush1.msra.mxu0 0.0
        %365 = vmatprep.subr.mxu0 0.0
        %366 = vmatpush1.msra.mxu0 0.0
        %367 = vmatprep.subr.mxu0 0.0
        %368 = vmatpush1.msra.mxu0 0.0
        %369 = vmatprep.subr.mxu0 0.0
        %370 = vmatpush1.msra.mxu0 0.0
        %371 = vmatprep.subr.mxu0 0.0
        %372 = vmatpush1.msra.mxu0 0.0
        %373 = vmatprep.subr.mxu0 0.0
        %374 = vmatpush1.msra.mxu0 0.0
        %375 = vmatprep.subr.mxu0 0.0
        %376 = vmatpush1.msra.mxu0 0.0
        %377 = vmatprep.subr.mxu0 0.0
        %378 = vmatpush1.msra.mxu0 0.0
        %379 = vmatprep.subr.mxu0 0.0
        %380 = vmatpush1.msra.mxu0 0.0
        %381 = vmatprep.subr.mxu0 0.0
        %382 = vmatpush1.msra.mxu0 0.0
        %383 = vmatprep.subr.mxu0 0.0
        %384 = vmatpush1.msra.mxu0 0.0
        %385 = vmatprep.subr.mxu0 0.0
        %386 = vmatpush1.msra.mxu0 0.0
        %v387 = vand.u32 %v349, 4294901760
        %388 = vmatprep.subr.mxu0 %v387
        %v389 = vand.u32 %v348, 4294901760
        %390 = vmatpush1.msra.mxu0 %v389
        %v391 = vand.u32 %v347, 4294901760
        %392 = vmatprep.subr.mxu0 %v391
        %v393 = vand.u32 %v346, 4294901760
        %394 = vmatpush1.msra.mxu0 %v393
        %v395 = vand.u32 %v345, 4294901760
        %396 = vmatprep.subr.mxu0 %v395
        %v397 = vand.u32 %v344, 4294901760
        %398 = vmatpush1.msra.mxu0 %v397
        %v399 = vand.u32 %v343, 4294901760
        %400 = vmatprep.subr.mxu0 %v399
        %v401 = vand.u32 %v342, 4294901760
        %402 = vmatpush1.msra.mxu0 %v401
        %403 = vmatprep.subr.mxu0 0.0
        %404 = vmatpush2.msra.mxu0 0.0
        %405 = vmatprep.subr.mxu0 0.0
        %406 = vmatpush2.msra.mxu0 0.0
        %407 = vmatprep.subr.mxu0 0.0
        %408 = vmatpush2.msra.mxu0 0.0
        %409 = vmatprep.subr.mxu0 0.0
        %410 = vmatpush2.msra.mxu0 0.0
        %411 = vmatprep.subr.mxu0 0.0
        %412 = vmatpush2.msra.mxu0 0.0
        %413 = vmatprep.subr.mxu0 0.0
        %414 = vmatpush2.msra.mxu0 0.0
        %415 = vmatprep.subr.mxu0 0.0
        %416 = vmatpush2.msra.mxu0 0.0
        %417 = vmatprep.subr.mxu0 0.0
        %418 = vmatpush2.msra.mxu0 0.0
        %419 = vmatprep.subr.mxu0 0.0
        %420 = vmatpush2.msra.mxu0 0.0
        %421 = vmatprep.subr.mxu0 0.0
        %422 = vmatpush2.msra.mxu0 0.0
        %423 = vmatprep.subr.mxu0 0.0
        %424 = vmatpush2.msra.mxu0 0.0
        %425 = vmatprep.subr.mxu0 0.0
        %426 = vmatpush2.msra.mxu0 0.0
        %427 = vmatprep.subr.mxu0 0.0
        %428 = vmatpush2.msra.mxu0 0.0
        %429 = vmatprep.subr.mxu0 0.0
        %430 = vmatpush2.msra.mxu0 0.0
        %431 = vmatprep.subr.mxu0 0.0
        %432 = vmatpush2.msra.mxu0 0.0
        %433 = vmatprep.subr.mxu0 0.0
        %434 = vmatpush2.msra.mxu0 0.0
        %435 = vmatprep.mubr.f32.mxu0 0.0
        %v436 = vand.u32 %v352, 4294901760
        %v437 = vsub.f32 %v352, %v436
        %v438 = vand.u32 %v437, 4294901760
        %v439 = vsub.f32 %v437, %v438
        %v440 = vand.u32 %v439, 4294901760
        %441 = vmatmul.mubr.f32.gmra.mxu0 %v440
        %v442 = vpop.f32.mrf.mxu0
        %v443 = vadd.f32 0.0, %v442
        %v444 = vpop.f32.mrf.mxu0
        %v445 = vadd.f32 0.0, %v444
        %446 = vmatprep.mubr.f32.mxu0 0.0
        %v447 = vand.u32 %v355, 4294901760
        %v448 = vsub.f32 %v355, %v447
        %v449 = vand.u32 %v448, 4294901760
        %v450 = vsub.f32 %v448, %v449
        %v451 = vand.u32 %v450, 4294901760
        %452 = vmatmul.mubr.f32.gmra.mxu0 %v451
        %v453 = vpop.f32.mrf.mxu0
        %v454 = vadd.f32 0.0, %v453
        %v455 = vpop.f32.mrf.mxu0
        %v456 = vadd.f32 0.0, %v455
        %457 = vmatprep.mubr.f32.mxu0 0.0
        %v458 = vand.u32 %v358, 4294901760
        %v459 = vsub.f32 %v358, %v458
        %v460 = vand.u32 %v459, 4294901760
        %v461 = vsub.f32 %v459, %v460
        %v462 = vand.u32 %v461, 4294901760
        %463 = vmatmul.mubr.f32.gmra.mxu0 %v462
        %v464 = vpop.f32.mrf.mxu0
        %v465 = vadd.f32 0.0, %v464
        %v466 = vpop.f32.mrf.mxu0
        %v467 = vadd.f32 0.0, %v466
        %468 = vmatprep.mubr.f32.mxu0 0.0
        %v469 = vand.u32 %v361, 4294901760
        %v470 = vsub.f32 %v361, %v469
        %v471 = vand.u32 %v470, 4294901760
        %v472 = vsub.f32 %v470, %v471
        %v473 = vand.u32 %v472, 4294901760
        %474 = vmatmul.mubr.f32.gmra.mxu0 %v473
        %v475 = vpop.f32.mrf.mxu0
        %v476 = vadd.f32 0.0, %v475
        %v477 = vpop.f32.mrf.mxu0
        %v478 = vadd.f32 0.0, %v477
        %479 = vdwg.mxu0
        %480 = vmatprep.subr.mxu0 0.0
        %481 = vmatpush1.msra.mxu0 0.0
        %482 = vmatprep.subr.mxu0 0.0
        %483 = vmatpush1.msra.mxu0 0.0
        %484 = vmatprep.subr.mxu0 0.0
        %485 = vmatpush1.msra.mxu0 0.0
        %486 = vmatprep.subr.mxu0 0.0
        %487 = vmatpush1.msra.mxu0 0.0
        %488 = vmatprep.subr.mxu0 0.0
        %489 = vmatpush1.msra.mxu0 0.0
        %490 = vmatprep.subr.mxu0 0.0
        %491 = vmatpush1.msra.mxu0 0.0
        %492 = vmatprep.subr.mxu0 0.0
        %493 = vmatpush1.msra.mxu0 0.0
        %494 = vmatprep.subr.mxu0 0.0
        %495 = vmatpush1.msra.mxu0 0.0
        %496 = vmatprep.subr.mxu0 0.0
        %497 = vmatpush1.msra.mxu0 0.0
        %498 = vmatprep.subr.mxu0 0.0
        %499 = vmatpush1.msra.mxu0 0.0
        %500 = vmatprep.subr.mxu0 0.0
        %501 = vmatpush1.msra.mxu0 0.0
        %502 = vmatprep.subr.mxu0 0.0
        %503 = vmatpush1.msra.mxu0 0.0
        %v504 = vand.u32 %v349, 4294901760
        %v505 = vsub.f32 %v349, %v504
        %v506 = vand.u32 %v505, 4294901760
        %v507 = vsub.f32 %v505, %v506
        %v508 = vand.u32 %v507, 4294901760
        %509 = vmatprep.subr.mxu0 %v508
        %v510 = vand.u32 %v348, 4294901760
        %v511 = vsub.f32 %v348, %v510
        %v512 = vand.u32 %v511, 4294901760
        %v513 = vsub.f32 %v511, %v512
        %v514 = vand.u32 %v513, 4294901760
        %515 = vmatpush1.msra.mxu0 %v514
        %v516 = vand.u32 %v347, 4294901760
        %v517 = vsub.f32 %v347, %v516
        %v518 = vand.u32 %v517, 4294901760
        %v519 = vsub.f32 %v517, %v518
        %v520 = vand.u32 %v519, 4294901760
        %521 = vmatprep.subr.mxu0 %v520
        %v522 = vand.u32 %v346, 4294901760
        %v523 = vsub.f32 %v346, %v522
        %v524 = vand.u32 %v523, 4294901760
        %v525 = vsub.f32 %v523, %v524
        %v526 = vand.u32 %v525, 4294901760
        %527 = vmatpush1.msra.mxu0 %v526
        %v528 = vand.u32 %v345, 4294901760
        %v529 = vsub.f32 %v345, %v528
        %v530 = vand.u32 %v529, 4294901760
        %v531 = vsub.f32 %v529, %v530
        %v532 = vand.u32 %v531, 4294901760
        %533 = vmatprep.subr.mxu0 %v532
        %v534 = vand.u32 %v344, 4294901760
        %v535 = vsub.f32 %v344, %v534
        %v536 = vand.u32 %v535, 4294901760
        %v537 = vsub.f32 %v535, %v536
        %v538 = vand.u32 %v537, 4294901760
        %539 = vmatpush1.msra.mxu0 %v538
        %v540 = vand.u32 %v343, 4294901760
        %v541 = vsub.f32 %v343, %v540
        %v542 = vand.u32 %v541, 4294901760
        %v543 = vsub.f32 %v541, %v542
        %v544 = vand.u32 %v543, 4294901760
        %545 = vmatprep.subr.mxu0 %v544
        %v546 = vand.u32 %v342, 4294901760
        %v547 = vsub.f32 %v342, %v546
        %v548 = vand.u32 %v547, 4294901760
        %v549 = vsub.f32 %v547, %v548
        %v550 = vand.u32 %v549, 4294901760
        %551 = vmatpush1.msra.mxu0 %v550
        %552 = vmatprep.subr.mxu0 0.0
        %553 = vmatpush2.msra.mxu0 0.0
        %554 = vmatprep.subr.mxu0 0.0
        %555 = vmatpush2.msra.mxu0 0.0
        %556 = vmatprep.subr.mxu0 0.0
        %557 = vmatpush2.msra.mxu0 0.0
        %558 = vmatprep.subr.mxu0 0.0
        %559 = vmatpush2.msra.mxu0 0.0
        %560 = vmatprep.subr.mxu0 0.0
        %561 = vmatpush2.msra.mxu0 0.0
        %562 = vmatprep.subr.mxu0 0.0
        %563 = vmatpush2.msra.mxu0 0.0
        %564 = vmatprep.subr.mxu0 0.0
        %565 = vmatpush2.msra.mxu0 0.0
        %566 = vmatprep.subr.mxu0 0.0
        %567 = vmatpush2.msra.mxu0 0.0
        %568 = vmatprep.subr.mxu0 0.0
        %569 = vmatpush2.msra.mxu0 0.0
        %570 = vmatprep.subr.mxu0 0.0
        %571 = vmatpush2.msra.mxu0 0.0
        %572 = vmatprep.subr.mxu0 0.0
        %573 = vmatpush2.msra.mxu0 0.0
        %574 = vmatprep.subr.mxu0 0.0
        %575 = vmatpush2.msra.mxu0 0.0
        %576 = vmatprep.subr.mxu0 0.0
        %577 = vmatpush2.msra.mxu0 0.0
        %578 = vmatprep.subr.mxu0 0.0
        %579 = vmatpush2.msra.mxu0 0.0
        %580 = vmatprep.subr.mxu0 0.0
        %581 = vmatpush2.msra.mxu0 0.0
        %582 = vmatprep.subr.mxu0 0.0
        %583 = vmatpush2.msra.mxu0 0.0
        %584 = vmatprep.mubr.f32.mxu0 0.0
        %v585 = vand.u32 %v352, 4294901760
        %586 = vmatmul.mubr.f32.gmra.mxu0 %v585
        %v587 = vpop.f32.mrf.mxu0
        %v588 = vadd.f32 %v443, %v587
        %v589 = vpop.f32.mrf.mxu0
        %v590 = vadd.f32 %v445, %v589
        %591 = vmatprep.mubr.f32.mxu0 0.0
        %v592 = vand.u32 %v355, 4294901760
        %593 = vmatmul.mubr.f32.gmra.mxu0 %v592
        %v594 = vpop.f32.mrf.mxu0
        %v595 = vadd.f32 %v454, %v594
        %v596 = vpop.f32.mrf.mxu0
        %v597 = vadd.f32 %v456, %v596
        %598 = vmatprep.mubr.f32.mxu0 0.0
        %v599 = vand.u32 %v358, 4294901760
        %600 = vmatmul.mubr.f32.gmra.mxu0 %v599
        %v601 = vpop.f32.mrf.mxu0
        %v602 = vadd.f32 %v465, %v601
        %v603 = vpop.f32.mrf.mxu0
        %v604 = vadd.f32 %v467, %v603
        %605 = vmatprep.mubr.f32.mxu0 0.0
        %v606 = vand.u32 %v361, 4294901760
        %607 = vmatmul.mubr.f32.gmra.mxu0 %v606
        %v608 = vpop.f32.mrf.mxu0
        %v609 = vadd.f32 %v476, %v608
        %v610 = vpop.f32.mrf.mxu0
        %v611 = vadd.f32 %v478, %v610
        %612 = vdwg.mxu0
        %613 = vmatprep.subr.mxu0 0.0
        %614 = vmatpush1.msra.mxu0 0.0
        %615 = vmatprep.subr.mxu0 0.0
        %616 = vmatpush1.msra.mxu0 0.0
        %617 = vmatprep.subr.mxu0 0.0
        %618 = vmatpush1.msra.mxu0 0.0
        %619 = vmatprep.subr.mxu0 0.0
        %620 = vmatpush1.msra.mxu0 0.0
        %621 = vmatprep.subr.mxu0 0.0
        %622 = vmatpush1.msra.mxu0 0.0
        %623 = vmatprep.subr.mxu0 0.0
        %624 = vmatpush1.msra.mxu0 0.0
        %625 = vmatprep.subr.mxu0 0.0
        %626 = vmatpush1.msra.mxu0 0.0
        %627 = vmatprep.subr.mxu0 0.0
        %628 = vmatpush1.msra.mxu0 0.0
        %629 = vmatprep.subr.mxu0 0.0
        %630 = vmatpush1.msra.mxu0 0.0
        %631 = vmatprep.subr.mxu0 0.0
        %632 = vmatpush1.msra.mxu0 0.0
        %633 = vmatprep.subr.mxu0 0.0
        %634 = vmatpush1.msra.mxu0 0.0
        %635 = vmatprep.subr.mxu0 0.0
        %636 = vmatpush1.msra.mxu0 0.0
        %v637 = vand.u32 %v349, 4294901760
        %v638 = vsub.f32 %v349, %v637
        %639 = vmatprep.subr.mxu0 %v638
        %v640 = vand.u32 %v348, 4294901760
        %v641 = vsub.f32 %v348, %v640
        %642 = vmatpush1.msra.mxu0 %v641
        %v643 = vand.u32 %v347, 4294901760
        %v644 = vsub.f32 %v347, %v643
        %645 = vmatprep.subr.mxu0 %v644
        %v646 = vand.u32 %v346, 4294901760
        %v647 = vsub.f32 %v346, %v646
        %648 = vmatpush1.msra.mxu0 %v647
        %v649 = vand.u32 %v345, 4294901760
        %v650 = vsub.f32 %v345, %v649
        %651 = vmatprep.subr.mxu0 %v650
        %v652 = vand.u32 %v344, 4294901760
        %v653 = vsub.f32 %v344, %v652
        %654 = vmatpush1.msra.mxu0 %v653
        %v655 = vand.u32 %v343, 4294901760
        %v656 = vsub.f32 %v343, %v655
        %657 = vmatprep.subr.mxu0 %v656
        %v658 = vand.u32 %v342, 4294901760
        %v659 = vsub.f32 %v342, %v658
        %660 = vmatpush1.msra.mxu0 %v659
        %661 = vmatprep.subr.mxu0 0.0
        %662 = vmatpush2.msra.mxu0 0.0
        %663 = vmatprep.subr.mxu0 0.0
        %664 = vmatpush2.msra.mxu0 0.0
        %665 = vmatprep.subr.mxu0 0.0
        %666 = vmatpush2.msra.mxu0 0.0
        %667 = vmatprep.subr.mxu0 0.0
        %668 = vmatpush2.msra.mxu0 0.0
        %669 = vmatprep.subr.mxu0 0.0
        %670 = vmatpush2.msra.mxu0 0.0
        %671 = vmatprep.subr.mxu0 0.0
        %672 = vmatpush2.msra.mxu0 0.0
        %673 = vmatprep.subr.mxu0 0.0
        %674 = vmatpush2.msra.mxu0 0.0
        %675 = vmatprep.subr.mxu0 0.0
        %676 = vmatpush2.msra.mxu0 0.0
        %677 = vmatprep.subr.mxu0 0.0
        %678 = vmatpush2.msra.mxu0 0.0
        %679 = vmatprep.subr.mxu0 0.0
        %680 = vmatpush2.msra.mxu0 0.0
        %681 = vmatprep.subr.mxu0 0.0
        %682 = vmatpush2.msra.mxu0 0.0
        %683 = vmatprep.subr.mxu0 0.0
        %684 = vmatpush2.msra.mxu0 0.0
        %685 = vmatprep.subr.mxu0 0.0
        %686 = vmatpush2.msra.mxu0 0.0
        %687 = vmatprep.subr.mxu0 0.0
        %688 = vmatpush2.msra.mxu0 0.0
        %689 = vmatprep.subr.mxu0 0.0
        %690 = vmatpush2.msra.mxu0 0.0
        %691 = vmatprep.subr.mxu0 0.0
        %692 = vmatpush2.msra.mxu0 0.0
        %693 = vmatprep.mubr.f32.mxu0 0.0
        %v694 = vand.u32 %v352, 4294901760
        %v695 = vsub.f32 %v352, %v694
        %696 = vmatmul.mubr.f32.gmra.mxu0 %v695
        %v697 = vpop.f32.mrf.mxu0
        %v698 = vadd.f32 %v588, %v697
        %v699 = vpop.f32.mrf.mxu0
        %v700 = vadd.f32 %v590, %v699
        %701 = vmatprep.mubr.f32.mxu0 0.0
        %v702 = vand.u32 %v355, 4294901760
        %v703 = vsub.f32 %v355, %v702
        %704 = vmatmul.mubr.f32.gmra.mxu0 %v703
        %v705 = vpop.f32.mrf.mxu0
        %v706 = vadd.f32 %v595, %v705
        %v707 = vpop.f32.mrf.mxu0
        %v708 = vadd.f32 %v597, %v707
        %709 = vmatprep.mubr.f32.mxu0 0.0
        %v710 = vand.u32 %v358, 4294901760
        %v711 = vsub.f32 %v358, %v710
        %712 = vmatmul.mubr.f32.gmra.mxu0 %v711
        %v713 = vpop.f32.mrf.mxu0
        %v714 = vadd.f32 %v602, %v713
        %v715 = vpop.f32.mrf.mxu0
        %v716 = vadd.f32 %v604, %v715
        %717 = vmatprep.mubr.f32.mxu0 0.0
        %v718 = vand.u32 %v361, 4294901760
        %v719 = vsub.f32 %v361, %v718
        %720 = vmatmul.mubr.f32.gmra.mxu0 %v719
        %v721 = vpop.f32.mrf.mxu0
        %v722 = vadd.f32 %v609, %v721
        %v723 = vpop.f32.mrf.mxu0
        %v724 = vadd.f32 %v611, %v723
        %725 = vdwg.mxu0
        %726 = vmatprep.subr.mxu0 0.0
        %727 = vmatpush1.msra.mxu0 0.0
        %728 = vmatprep.subr.mxu0 0.0
        %729 = vmatpush1.msra.mxu0 0.0
        %730 = vmatprep.subr.mxu0 0.0
        %731 = vmatpush1.msra.mxu0 0.0
        %732 = vmatprep.subr.mxu0 0.0
        %733 = vmatpush1.msra.mxu0 0.0
        %734 = vmatprep.subr.mxu0 0.0
        %735 = vmatpush1.msra.mxu0 0.0
        %736 = vmatprep.subr.mxu0 0.0
        %737 = vmatpush1.msra.mxu0 0.0
        %738 = vmatprep.subr.mxu0 0.0
        %739 = vmatpush1.msra.mxu0 0.0
        %740 = vmatprep.subr.mxu0 0.0
        %741 = vmatpush1.msra.mxu0 0.0
        %742 = vmatprep.subr.mxu0 0.0
        %743 = vmatpush1.msra.mxu0 0.0
        %744 = vmatprep.subr.mxu0 0.0
        %745 = vmatpush1.msra.mxu0 0.0
        %746 = vmatprep.subr.mxu0 0.0
        %747 = vmatpush1.msra.mxu0 0.0
        %748 = vmatprep.subr.mxu0 0.0
        %749 = vmatpush1.msra.mxu0 0.0
        %v750 = vand.u32 %v349, 4294901760
        %751 = vmatprep.subr.mxu0 %v750
        %v752 = vand.u32 %v348, 4294901760
        %753 = vmatpush1.msra.mxu0 %v752
        %v754 = vand.u32 %v347, 4294901760
        %755 = vmatprep.subr.mxu0 %v754
        %v756 = vand.u32 %v346, 4294901760
        %757 = vmatpush1.msra.mxu0 %v756
        %v758 = vand.u32 %v345, 4294901760
        %759 = vmatprep.subr.mxu0 %v758
        %v760 = vand.u32 %v344, 4294901760
        %761 = vmatpush1.msra.mxu0 %v760
        %v762 = vand.u32 %v343, 4294901760
        %763 = vmatprep.subr.mxu0 %v762
        %v764 = vand.u32 %v342, 4294901760
        %765 = vmatpush1.msra.mxu0 %v764
        %766 = vmatprep.subr.mxu0 0.0
        %767 = vmatpush2.msra.mxu0 0.0
        %768 = vmatprep.subr.mxu0 0.0
        %769 = vmatpush2.msra.mxu0 0.0
        %770 = vmatprep.subr.mxu0 0.0
        %771 = vmatpush2.msra.mxu0 0.0
        %772 = vmatprep.subr.mxu0 0.0
        %773 = vmatpush2.msra.mxu0 0.0
        %774 = vmatprep.subr.mxu0 0.0
        %775 = vmatpush2.msra.mxu0 0.0
        %776 = vmatprep.subr.mxu0 0.0
        %777 = vmatpush2.msra.mxu0 0.0
        %778 = vmatprep.subr.mxu0 0.0
        %779 = vmatpush2.msra.mxu0 0.0
        %780 = vmatprep.subr.mxu0 0.0
        %781 = vmatpush2.msra.mxu0 0.0
        %782 = vmatprep.subr.mxu0 0.0
        %783 = vmatpush2.msra.mxu0 0.0
        %784 = vmatprep.subr.mxu0 0.0
        %785 = vmatpush2.msra.mxu0 0.0
        %786 = vmatprep.subr.mxu0 0.0
        %787 = vmatpush2.msra.mxu0 0.0
        %788 = vmatprep.subr.mxu0 0.0
        %789 = vmatpush2.msra.mxu0 0.0
        %790 = vmatprep.subr.mxu0 0.0
        %791 = vmatpush2.msra.mxu0 0.0
        %792 = vmatprep.subr.mxu0 0.0
        %793 = vmatpush2.msra.mxu0 0.0
        %794 = vmatprep.subr.mxu0 0.0
        %795 = vmatpush2.msra.mxu0 0.0
        %796 = vmatprep.subr.mxu0 0.0
        %797 = vmatpush2.msra.mxu0 0.0
        %798 = vmatprep.mubr.f32.mxu0 0.0
        %v799 = vand.u32 %v352, 4294901760
        %v800 = vsub.f32 %v352, %v799
        %v801 = vand.u32 %v800, 4294901760
        %802 = vmatmul.mubr.f32.gmra.mxu0 %v801
        %v803 = vpop.f32.mrf.mxu0
        %v804 = vadd.f32 %v698, %v803
        %v805 = vpop.f32.mrf.mxu0
        %v806 = vadd.f32 %v700, %v805
        %807 = vmatprep.mubr.f32.mxu0 0.0
        %v808 = vand.u32 %v355, 4294901760
        %v809 = vsub.f32 %v355, %v808
        %v810 = vand.u32 %v809, 4294901760
        %811 = vmatmul.mubr.f32.gmra.mxu0 %v810
        %v812 = vpop.f32.mrf.mxu0
        %v813 = vadd.f32 %v706, %v812
        %v814 = vpop.f32.mrf.mxu0
        %v815 = vadd.f32 %v708, %v814
        %816 = vmatprep.mubr.f32.mxu0 0.0
        %v817 = vand.u32 %v358, 4294901760
        %v818 = vsub.f32 %v358, %v817
        %v819 = vand.u32 %v818, 4294901760
        %820 = vmatmul.mubr.f32.gmra.mxu0 %v819
        %v821 = vpop.f32.mrf.mxu0
        %v822 = vadd.f32 %v714, %v821
        %v823 = vpop.f32.mrf.mxu0
        %v824 = vadd.f32 %v716, %v823
        %825 = vmatprep.mubr.f32.mxu0 0.0
        %v826 = vand.u32 %v361, 4294901760
        %v827 = vsub.f32 %v361, %v826
        %v828 = vand.u32 %v827, 4294901760
        %829 = vmatmul.mubr.f32.gmra.mxu0 %v828
        %v830 = vpop.f32.mrf.mxu0
        %v831 = vadd.f32 %v722, %v830
        %v832 = vpop.f32.mrf.mxu0
        %v833 = vadd.f32 %v724, %v832
        %834 = vdwg.mxu0
        %835 = vmatprep.subr.mxu0 0.0
        %836 = vmatpush1.msra.mxu0 0.0
        %837 = vmatprep.subr.mxu0 0.0
        %838 = vmatpush1.msra.mxu0 0.0
        %839 = vmatprep.subr.mxu0 0.0
        %840 = vmatpush1.msra.mxu0 0.0
        %841 = vmatprep.subr.mxu0 0.0
        %842 = vmatpush1.msra.mxu0 0.0
        %843 = vmatprep.subr.mxu0 0.0
        %844 = vmatpush1.msra.mxu0 0.0
        %845 = vmatprep.subr.mxu0 0.0
        %846 = vmatpush1.msra.mxu0 0.0
        %847 = vmatprep.subr.mxu0 0.0
        %848 = vmatpush1.msra.mxu0 0.0
        %849 = vmatprep.subr.mxu0 0.0
        %850 = vmatpush1.msra.mxu0 0.0
        %851 = vmatprep.subr.mxu0 0.0
        %852 = vmatpush1.msra.mxu0 0.0
        %853 = vmatprep.subr.mxu0 0.0
        %854 = vmatpush1.msra.mxu0 0.0
        %855 = vmatprep.subr.mxu0 0.0
        %856 = vmatpush1.msra.mxu0 0.0
        %857 = vmatprep.subr.mxu0 0.0
        %858 = vmatpush1.msra.mxu0 0.0
        %v859 = vand.u32 %v349, 4294901760
        %v860 = vsub.f32 %v349, %v859
        %v861 = vand.u32 %v860, 4294901760
        %862 = vmatprep.subr.mxu0 %v861
        %v863 = vand.u32 %v348, 4294901760
        %v864 = vsub.f32 %v348, %v863
        %v865 = vand.u32 %v864, 4294901760
        %866 = vmatpush1.msra.mxu0 %v865
        %v867 = vand.u32 %v347, 4294901760
        %v868 = vsub.f32 %v347, %v867
        %v869 = vand.u32 %v868, 4294901760
        %870 = vmatprep.subr.mxu0 %v869
        %v871 = vand.u32 %v346, 4294901760
        %v872 = vsub.f32 %v346, %v871
        %v873 = vand.u32 %v872, 4294901760
        %874 = vmatpush1.msra.mxu0 %v873
        %v875 = vand.u32 %v345, 4294901760
        %v876 = vsub.f32 %v345, %v875
        %v877 = vand.u32 %v876, 4294901760
        %878 = vmatprep.subr.mxu0 %v877
        %v879 = vand.u32 %v344, 4294901760
        %v880 = vsub.f32 %v344, %v879
        %v881 = vand.u32 %v880, 4294901760
        %882 = vmatpush1.msra.mxu0 %v881
        %v883 = vand.u32 %v343, 4294901760
        %v884 = vsub.f32 %v343, %v883
        %v885 = vand.u32 %v884, 4294901760
        %886 = vmatprep.subr.mxu0 %v885
        %v887 = vand.u32 %v342, 4294901760
        %v888 = vsub.f32 %v342, %v887
        %v889 = vand.u32 %v888, 4294901760
        %890 = vmatpush1.msra.mxu0 %v889
        %891 = vmatprep.subr.mxu0 0.0
        %892 = vmatpush2.msra.mxu0 0.0
        %893 = vmatprep.subr.mxu0 0.0
        %894 = vmatpush2.msra.mxu0 0.0
        %895 = vmatprep.subr.mxu0 0.0
        %896 = vmatpush2.msra.mxu0 0.0
        %897 = vmatprep.subr.mxu0 0.0
        %898 = vmatpush2.msra.mxu0 0.0
        %899 = vmatprep.subr.mxu0 0.0
        %900 = vmatpush2.msra.mxu0 0.0
        %901 = vmatprep.subr.mxu0 0.0
        %902 = vmatpush2.msra.mxu0 0.0
        %903 = vmatprep.subr.mxu0 0.0
        %904 = vmatpush2.msra.mxu0 0.0
        %905 = vmatprep.subr.mxu0 0.0
        %906 = vmatpush2.msra.mxu0 0.0
        %907 = vmatprep.subr.mxu0 0.0
        %908 = vmatpush2.msra.mxu0 0.0
        %909 = vmatprep.subr.mxu0 0.0
        %910 = vmatpush2.msra.mxu0 0.0
        %911 = vmatprep.subr.mxu0 0.0
        %912 = vmatpush2.msra.mxu0 0.0
        %913 = vmatprep.subr.mxu0 0.0
        %914 = vmatpush2.msra.mxu0 0.0
        %915 = vmatprep.subr.mxu0 0.0
        %916 = vmatpush2.msra.mxu0 0.0
        %917 = vmatprep.subr.mxu0 0.0
        %918 = vmatpush2.msra.mxu0 0.0
        %919 = vmatprep.subr.mxu0 0.0
        %920 = vmatpush2.msra.mxu0 0.0
        %921 = vmatprep.subr.mxu0 0.0
        %922 = vmatpush2.msra.mxu0 0.0
        %923 = vmatprep.mubr.f32.mxu0 0.0
        %v924 = vand.u32 %v352, 4294901760
        %925 = vmatmul.mubr.f32.gmra.mxu0 %v924
        %v926 = vpop.f32.mrf.mxu0
        %v927 = vadd.f32 %v804, %v926
        %v928 = vpop.f32.mrf.mxu0
        %v929 = vadd.f32 %v806, %v928
        %930 = vmatprep.mubr.f32.mxu0 0.0
        %v931 = vand.u32 %v355, 4294901760
        %932 = vmatmul.mubr.f32.gmra.mxu0 %v931
        %v933 = vpop.f32.mrf.mxu0
        %v934 = vadd.f32 %v813, %v933
        %v935 = vpop.f32.mrf.mxu0
        %v936 = vadd.f32 %v815, %v935
        %937 = vmatprep.mubr.f32.mxu0 0.0
        %v938 = vand.u32 %v358, 4294901760
        %939 = vmatmul.mubr.f32.gmra.mxu0 %v938
        %v940 = vpop.f32.mrf.mxu0
        %v941 = vadd.f32 %v822, %v940
        %v942 = vpop.f32.mrf.mxu0
        %v943 = vadd.f32 %v824, %v942
        %944 = vmatprep.mubr.f32.mxu0 0.0
        %v945 = vand.u32 %v361, 4294901760
        %946 = vmatmul.mubr.f32.gmra.mxu0 %v945
        %v947 = vpop.f32.mrf.mxu0
        %v948 = vadd.f32 %v831, %v947
        %v949 = vpop.f32.mrf.mxu0
        %v950 = vadd.f32 %v833, %v949
        %951 = vdwg.mxu0
        %952 = vmatprep.subr.mxu0 0.0
        %953 = vmatpush1.msra.mxu0 0.0
        %954 = vmatprep.subr.mxu0 0.0
        %955 = vmatpush1.msra.mxu0 0.0
        %956 = vmatprep.subr.mxu0 0.0
        %957 = vmatpush1.msra.mxu0 0.0
        %958 = vmatprep.subr.mxu0 0.0
        %959 = vmatpush1.msra.mxu0 0.0
        %960 = vmatprep.subr.mxu0 0.0
        %961 = vmatpush1.msra.mxu0 0.0
        %962 = vmatprep.subr.mxu0 0.0
        %963 = vmatpush1.msra.mxu0 0.0
        %964 = vmatprep.subr.mxu0 0.0
        %965 = vmatpush1.msra.mxu0 0.0
        %966 = vmatprep.subr.mxu0 0.0
        %967 = vmatpush1.msra.mxu0 0.0
        %968 = vmatprep.subr.mxu0 0.0
        %969 = vmatpush1.msra.mxu0 0.0
        %970 = vmatprep.subr.mxu0 0.0
        %971 = vmatpush1.msra.mxu0 0.0
        %972 = vmatprep.subr.mxu0 0.0
        %973 = vmatpush1.msra.mxu0 0.0
        %974 = vmatprep.subr.mxu0 0.0
        %975 = vmatpush1.msra.mxu0 0.0
        %v976 = vand.u32 %v349, 4294901760
        %977 = vmatprep.subr.mxu0 %v976
        %v978 = vand.u32 %v348, 4294901760
        %979 = vmatpush1.msra.mxu0 %v978
        %v980 = vand.u32 %v347, 4294901760
        %981 = vmatprep.subr.mxu0 %v980
        %v982 = vand.u32 %v346, 4294901760
        %983 = vmatpush1.msra.mxu0 %v982
        %v984 = vand.u32 %v345, 4294901760
        %985 = vmatprep.subr.mxu0 %v984
        %v986 = vand.u32 %v344, 4294901760
        %987 = vmatpush1.msra.mxu0 %v986
        %v988 = vand.u32 %v343, 4294901760
        %989 = vmatprep.subr.mxu0 %v988
        %v990 = vand.u32 %v342, 4294901760
        %991 = vmatpush1.msra.mxu0 %v990
        %992 = vmatprep.subr.mxu0 0.0
        %993 = vmatpush2.msra.mxu0 0.0
        %994 = vmatprep.subr.mxu0 0.0
        %995 = vmatpush2.msra.mxu0 0.0
        %996 = vmatprep.subr.mxu0 0.0
        %997 = vmatpush2.msra.mxu0 0.0
        %998 = vmatprep.subr.mxu0 0.0
        %999 = vmatpush2.msra.mxu0 0.0
        %1000 = vmatprep.subr.mxu0 0.0
        %1001 = vmatpush2.msra.mxu0 0.0
        %1002 = vmatprep.subr.mxu0 0.0
        %1003 = vmatpush2.msra.mxu0 0.0
        %1004 = vmatprep.subr.mxu0 0.0
        %1005 = vmatpush2.msra.mxu0 0.0
        %1006 = vmatprep.subr.mxu0 0.0
        %1007 = vmatpush2.msra.mxu0 0.0
        %1008 = vmatprep.subr.mxu0 0.0
        %1009 = vmatpush2.msra.mxu0 0.0
        %1010 = vmatprep.subr.mxu0 0.0
        %1011 = vmatpush2.msra.mxu0 0.0
        %1012 = vmatprep.subr.mxu0 0.0
        %1013 = vmatpush2.msra.mxu0 0.0
        %1014 = vmatprep.subr.mxu0 0.0
        %1015 = vmatpush2.msra.mxu0 0.0
        %1016 = vmatprep.subr.mxu0 0.0
        %1017 = vmatpush2.msra.mxu0 0.0
        %1018 = vmatprep.subr.mxu0 0.0
        %1019 = vmatpush2.msra.mxu0 0.0
        %1020 = vmatprep.subr.mxu0 0.0
        %1021 = vmatpush2.msra.mxu0 0.0
        %1022 = vmatprep.subr.mxu0 0.0
        %1023 = vmatpush2.msra.mxu0 0.0
        %1024 = vmatprep.mubr.f32.mxu0 0.0
        %v1025 = vand.u32 %v352, 4294901760
        %1026 = vmatmul.mubr.f32.gmra.mxu0 %v1025
        %v1027 = vpop.f32.mrf.mxu0
        %v1028 = vadd.f32 %v927, %v1027
        %v1029 = vpop.f32.mrf.mxu0
        %v1030 = vadd.f32 %v929, %v1029
        %1031 = vmatprep.mubr.f32.mxu0 0.0
        %v1032 = vand.u32 %v355, 4294901760
        %1033 = vmatmul.mubr.f32.gmra.mxu0 %v1032
        %v1034 = vpop.f32.mrf.mxu0
        %v1035 = vadd.f32 %v934, %v1034
        %v1036 = vpop.f32.mrf.mxu0
        %v1037 = vadd.f32 %v936, %v1036
        %1038 = vmatprep.mubr.f32.mxu0 0.0
        %v1039 = vand.u32 %v358, 4294901760
        %1040 = vmatmul.mubr.f32.gmra.mxu0 %v1039
        %v1041 = vpop.f32.mrf.mxu0
        %v1042 = vadd.f32 %v941, %v1041
        %v1043 = vpop.f32.mrf.mxu0
        %v1044 = vadd.f32 %v943, %v1043
        %1045 = vmatprep.mubr.f32.mxu0 0.0
        %v1046 = vand.u32 %v361, 4294901760
        %1047 = vmatmul.mubr.f32.gmra.mxu0 %v1046
        %v1048 = vpop.f32.mrf.mxu0
        %v1049 = vadd.f32 %v948, %v1048
        %v1050 = vpop.f32.mrf.mxu0
        %v1051 = vadd.f32 %v950, %v1050
        %1052 = vdwg.mxu0
        %v1054 = vsel %vm350, %v326, 0
        %v1057 = vsel %vm350, %v327, 0
        %v1060 = vsel %vm350, %v328, 0
        %v1063 = vsel %vm350, %v329, 0
        %1065 = vmatprep.subr.mxu0 0.0
        %1066 = vmatpush1.msra.mxu0 0.0
        %1067 = vmatprep.subr.mxu0 0.0
        %1068 = vmatpush1.msra.mxu0 0.0
        %1069 = vmatprep.subr.mxu0 0.0
        %1070 = vmatpush1.msra.mxu0 0.0
        %1071 = vmatprep.subr.mxu0 0.0
        %1072 = vmatpush1.msra.mxu0 0.0
        %1073 = vmatprep.subr.mxu0 0.0
        %1074 = vmatpush1.msra.mxu0 0.0
        %1075 = vmatprep.subr.mxu0 0.0
        %1076 = vmatpush1.msra.mxu0 0.0
        %1077 = vmatprep.subr.mxu0 0.0
        %1078 = vmatpush1.msra.mxu0 0.0
        %1079 = vmatprep.subr.mxu0 0.0
        %1080 = vmatpush1.msra.mxu0 0.0
        %1081 = vmatprep.subr.mxu0 0.0
        %1082 = vmatpush1.msra.mxu0 0.0
        %1083 = vmatprep.subr.mxu0 0.0
        %1084 = vmatpush1.msra.mxu0 0.0
        %1085 = vmatprep.subr.mxu0 0.0
        %1086 = vmatpush1.msra.mxu0 0.0
        %1087 = vmatprep.subr.mxu0 0.0
        %1088 = vmatpush1.msra.mxu0 0.0
        %v1089 = vand.u32 %v341, 4294901760
        %1090 = vmatprep.subr.mxu0 %v1089
        %v1091 = vand.u32 %v340, 4294901760
        %1092 = vmatpush1.msra.mxu0 %v1091
        %v1093 = vand.u32 %v339, 4294901760
        %1094 = vmatprep.subr.mxu0 %v1093
        %v1095 = vand.u32 %v338, 4294901760
        %1096 = vmatpush1.msra.mxu0 %v1095
        %v1097 = vand.u32 %v337, 4294901760
        %1098 = vmatprep.subr.mxu0 %v1097
        %v1099 = vand.u32 %v336, 4294901760
        %1100 = vmatpush1.msra.mxu0 %v1099
        %v1101 = vand.u32 %v335, 4294901760
        %1102 = vmatprep.subr.mxu0 %v1101
        %v1103 = vand.u32 %v334, 4294901760
        %1104 = vmatpush1.msra.mxu0 %v1103
        %1105 = vmatprep.subr.mxu0 0.0
        %1106 = vmatpush2.msra.mxu0 0.0
        %1107 = vmatprep.subr.mxu0 0.0
        %1108 = vmatpush2.msra.mxu0 0.0
        %1109 = vmatprep.subr.mxu0 0.0
        %1110 = vmatpush2.msra.mxu0 0.0
        %1111 = vmatprep.subr.mxu0 0.0
        %1112 = vmatpush2.msra.mxu0 0.0
        %1113 = vmatprep.subr.mxu0 0.0
        %1114 = vmatpush2.msra.mxu0 0.0
        %1115 = vmatprep.subr.mxu0 0.0
        %1116 = vmatpush2.msra.mxu0 0.0
        %1117 = vmatprep.subr.mxu0 0.0
        %1118 = vmatpush2.msra.mxu0 0.0
        %1119 = vmatprep.subr.mxu0 0.0
        %1120 = vmatpush2.msra.mxu0 0.0
        %1121 = vmatprep.subr.mxu0 0.0
        %1122 = vmatpush2.msra.mxu0 0.0
        %1123 = vmatprep.subr.mxu0 0.0
        %1124 = vmatpush2.msra.mxu0 0.0
        %1125 = vmatprep.subr.mxu0 0.0
        %1126 = vmatpush2.msra.mxu0 0.0
        %1127 = vmatprep.subr.mxu0 0.0
        %1128 = vmatpush2.msra.mxu0 0.0
        %1129 = vmatprep.subr.mxu0 0.0
        %1130 = vmatpush2.msra.mxu0 0.0
        %1131 = vmatprep.subr.mxu0 0.0
        %1132 = vmatpush2.msra.mxu0 0.0
        %1133 = vmatprep.subr.mxu0 0.0
        %1134 = vmatpush2.msra.mxu0 0.0
        %1135 = vmatprep.subr.mxu0 0.0
        %1136 = vmatpush2.msra.mxu0 0.0
        %1137 = vmatprep.mubr.f32.mxu0 0.0
        %v1138 = vand.u32 %v1054, 4294901760
        %v1139 = vsub.f32 %v1054, %v1138
        %v1140 = vand.u32 %v1139, 4294901760
        %v1141 = vsub.f32 %v1139, %v1140
        %v1142 = vand.u32 %v1141, 4294901760
        %1143 = vmatmul.mubr.f32.gmra.mxu0 %v1142
        %v1144 = vpop.f32.mrf.mxu0
        %v1145 = vadd.f32 %v1028, %v1144
        %v1146 = vpop.f32.mrf.mxu0
        %v1147 = vadd.f32 %v1030, %v1146
        %1148 = vmatprep.mubr.f32.mxu0 0.0
        %v1149 = vand.u32 %v1057, 4294901760
        %v1150 = vsub.f32 %v1057, %v1149
        %v1151 = vand.u32 %v1150, 4294901760
        %v1152 = vsub.f32 %v1150, %v1151
        %v1153 = vand.u32 %v1152, 4294901760
        %1154 = vmatmul.mubr.f32.gmra.mxu0 %v1153
        %v1155 = vpop.f32.mrf.mxu0
        %v1156 = vadd.f32 %v1035, %v1155
        %v1157 = vpop.f32.mrf.mxu0
        %v1158 = vadd.f32 %v1037, %v1157
        %1159 = vmatprep.mubr.f32.mxu0 0.0
        %v1160 = vand.u32 %v1060, 4294901760
        %v1161 = vsub.f32 %v1060, %v1160
        %v1162 = vand.u32 %v1161, 4294901760
        %v1163 = vsub.f32 %v1161, %v1162
        %v1164 = vand.u32 %v1163, 4294901760
        %1165 = vmatmul.mubr.f32.gmra.mxu0 %v1164
        %v1166 = vpop.f32.mrf.mxu0
        %v1167 = vadd.f32 %v1042, %v1166
        %v1168 = vpop.f32.mrf.mxu0
        %v1169 = vadd.f32 %v1044, %v1168
        %1170 = vmatprep.mubr.f32.mxu0 0.0
        %v1171 = vand.u32 %v1063, 4294901760
        %v1172 = vsub.f32 %v1063, %v1171
        %v1173 = vand.u32 %v1172, 4294901760
        %v1174 = vsub.f32 %v1172, %v1173
        %v1175 = vand.u32 %v1174, 4294901760
        %1176 = vmatmul.mubr.f32.gmra.mxu0 %v1175
        %v1177 = vpop.f32.mrf.mxu0
        %v1178 = vadd.f32 %v1049, %v1177
        %v1179 = vpop.f32.mrf.mxu0
        %v1180 = vadd.f32 %v1051, %v1179
        %1181 = vdwg.mxu0
        %1182 = vmatprep.subr.mxu0 0.0
        %1183 = vmatpush1.msra.mxu0 0.0
        %1184 = vmatprep.subr.mxu0 0.0
        %1185 = vmatpush1.msra.mxu0 0.0
        %1186 = vmatprep.subr.mxu0 0.0
        %1187 = vmatpush1.msra.mxu0 0.0
        %1188 = vmatprep.subr.mxu0 0.0
        %1189 = vmatpush1.msra.mxu0 0.0
        %1190 = vmatprep.subr.mxu0 0.0
        %1191 = vmatpush1.msra.mxu0 0.0
        %1192 = vmatprep.subr.mxu0 0.0
        %1193 = vmatpush1.msra.mxu0 0.0
        %1194 = vmatprep.subr.mxu0 0.0
        %1195 = vmatpush1.msra.mxu0 0.0
        %1196 = vmatprep.subr.mxu0 0.0
        %1197 = vmatpush1.msra.mxu0 0.0
        %1198 = vmatprep.subr.mxu0 0.0
        %1199 = vmatpush1.msra.mxu0 0.0
        %1200 = vmatprep.subr.mxu0 0.0
        %1201 = vmatpush1.msra.mxu0 0.0
        %1202 = vmatprep.subr.mxu0 0.0
        %1203 = vmatpush1.msra.mxu0 0.0
        %1204 = vmatprep.subr.mxu0 0.0
        %1205 = vmatpush1.msra.mxu0 0.0
        %v1206 = vand.u32 %v341, 4294901760
        %v1207 = vsub.f32 %v341, %v1206
        %v1208 = vand.u32 %v1207, 4294901760
        %v1209 = vsub.f32 %v1207, %v1208
        %v1210 = vand.u32 %v1209, 4294901760
        %1211 = vmatprep.subr.mxu0 %v1210
        %v1212 = vand.u32 %v340, 4294901760
        %v1213 = vsub.f32 %v340, %v1212
        %v1214 = vand.u32 %v1213, 4294901760
        %v1215 = vsub.f32 %v1213, %v1214
        %v1216 = vand.u32 %v1215, 4294901760
        %1217 = vmatpush1.msra.mxu0 %v1216
        %v1218 = vand.u32 %v339, 4294901760
        %v1219 = vsub.f32 %v339, %v1218
        %v1220 = vand.u32 %v1219, 4294901760
        %v1221 = vsub.f32 %v1219, %v1220
        %v1222 = vand.u32 %v1221, 4294901760
        %1223 = vmatprep.subr.mxu0 %v1222
        %v1224 = vand.u32 %v338, 4294901760
        %v1225 = vsub.f32 %v338, %v1224
        %v1226 = vand.u32 %v1225, 4294901760
        %v1227 = vsub.f32 %v1225, %v1226
        %v1228 = vand.u32 %v1227, 4294901760
        %1229 = vmatpush1.msra.mxu0 %v1228
        %v1230 = vand.u32 %v337, 4294901760
        %v1231 = vsub.f32 %v337, %v1230
        %v1232 = vand.u32 %v1231, 4294901760
        %v1233 = vsub.f32 %v1231, %v1232
        %v1234 = vand.u32 %v1233, 4294901760
        %1235 = vmatprep.subr.mxu0 %v1234
        %v1236 = vand.u32 %v336, 4294901760
        %v1237 = vsub.f32 %v336, %v1236
        %v1238 = vand.u32 %v1237, 4294901760
        %v1239 = vsub.f32 %v1237, %v1238
        %v1240 = vand.u32 %v1239, 4294901760
        %1241 = vmatpush1.msra.mxu0 %v1240
        %v1242 = vand.u32 %v335, 4294901760
        %v1243 = vsub.f32 %v335, %v1242
        %v1244 = vand.u32 %v1243, 4294901760
        %v1245 = vsub.f32 %v1243, %v1244
        %v1246 = vand.u32 %v1245, 4294901760
        %1247 = vmatprep.subr.mxu0 %v1246
        %v1248 = vand.u32 %v334, 4294901760
        %v1249 = vsub.f32 %v334, %v1248
        %v1250 = vand.u32 %v1249, 4294901760
        %v1251 = vsub.f32 %v1249, %v1250
        %v1252 = vand.u32 %v1251, 4294901760
        %1253 = vmatpush1.msra.mxu0 %v1252
        %1254 = vmatprep.subr.mxu0 0.0
        %1255 = vmatpush2.msra.mxu0 0.0
        %1256 = vmatprep.subr.mxu0 0.0
        %1257 = vmatpush2.msra.mxu0 0.0
        %1258 = vmatprep.subr.mxu0 0.0
        %1259 = vmatpush2.msra.mxu0 0.0
        %1260 = vmatprep.subr.mxu0 0.0
        %1261 = vmatpush2.msra.mxu0 0.0
        %1262 = vmatprep.subr.mxu0 0.0
        %1263 = vmatpush2.msra.mxu0 0.0
        %1264 = vmatprep.subr.mxu0 0.0
        %1265 = vmatpush2.msra.mxu0 0.0
        %1266 = vmatprep.subr.mxu0 0.0
        %1267 = vmatpush2.msra.mxu0 0.0
        %1268 = vmatprep.subr.mxu0 0.0
        %1269 = vmatpush2.msra.mxu0 0.0
        %1270 = vmatprep.subr.mxu0 0.0
        %1271 = vmatpush2.msra.mxu0 0.0
        %1272 = vmatprep.subr.mxu0 0.0
        %1273 = vmatpush2.msra.mxu0 0.0
        %1274 = vmatprep.subr.mxu0 0.0
        %1275 = vmatpush2.msra.mxu0 0.0
        %1276 = vmatprep.subr.mxu0 0.0
        %1277 = vmatpush2.msra.mxu0 0.0
        %1278 = vmatprep.subr.mxu0 0.0
        %1279 = vmatpush2.msra.mxu0 0.0
        %1280 = vmatprep.subr.mxu0 0.0
        %1281 = vmatpush2.msra.mxu0 0.0
        %1282 = vmatprep.subr.mxu0 0.0
        %1283 = vmatpush2.msra.mxu0 0.0
        %1284 = vmatprep.subr.mxu0 0.0
        %1285 = vmatpush2.msra.mxu0 0.0
        %1286 = vmatprep.mubr.f32.mxu0 0.0
        %v1287 = vand.u32 %v1054, 4294901760
        %1288 = vmatmul.mubr.f32.gmra.mxu0 %v1287
        %v1289 = vpop.f32.mrf.mxu0
        %v1290 = vadd.f32 %v1145, %v1289
        %v1291 = vpop.f32.mrf.mxu0
        %v1292 = vadd.f32 %v1147, %v1291
        %1293 = vmatprep.mubr.f32.mxu0 0.0
        %v1294 = vand.u32 %v1057, 4294901760
        %1295 = vmatmul.mubr.f32.gmra.mxu0 %v1294
        %v1296 = vpop.f32.mrf.mxu0
        %v1297 = vadd.f32 %v1156, %v1296
        %v1298 = vpop.f32.mrf.mxu0
        %v1299 = vadd.f32 %v1158, %v1298
        %1300 = vmatprep.mubr.f32.mxu0 0.0
        %v1301 = vand.u32 %v1060, 4294901760
        %1302 = vmatmul.mubr.f32.gmra.mxu0 %v1301
        %v1303 = vpop.f32.mrf.mxu0
        %v1304 = vadd.f32 %v1167, %v1303
        %v1305 = vpop.f32.mrf.mxu0
        %v1306 = vadd.f32 %v1169, %v1305
        %1307 = vmatprep.mubr.f32.mxu0 0.0
        %v1308 = vand.u32 %v1063, 4294901760
        %1309 = vmatmul.mubr.f32.gmra.mxu0 %v1308
        %v1310 = vpop.f32.mrf.mxu0
        %v1311 = vadd.f32 %v1178, %v1310
        %v1312 = vpop.f32.mrf.mxu0
        %v1313 = vadd.f32 %v1180, %v1312
        %1314 = vdwg.mxu0
        %1315 = vmatprep.subr.mxu0 0.0
        %1316 = vmatpush1.msra.mxu0 0.0
        %1317 = vmatprep.subr.mxu0 0.0
        %1318 = vmatpush1.msra.mxu0 0.0
        %1319 = vmatprep.subr.mxu0 0.0
        %1320 = vmatpush1.msra.mxu0 0.0
        %1321 = vmatprep.subr.mxu0 0.0
        %1322 = vmatpush1.msra.mxu0 0.0
        %1323 = vmatprep.subr.mxu0 0.0
        %1324 = vmatpush1.msra.mxu0 0.0
        %1325 = vmatprep.subr.mxu0 0.0
        %1326 = vmatpush1.msra.mxu0 0.0
        %1327 = vmatprep.subr.mxu0 0.0
        %1328 = vmatpush1.msra.mxu0 0.0
        %1329 = vmatprep.subr.mxu0 0.0
        %1330 = vmatpush1.msra.mxu0 0.0
        %1331 = vmatprep.subr.mxu0 0.0
        %1332 = vmatpush1.msra.mxu0 0.0
        %1333 = vmatprep.subr.mxu0 0.0
        %1334 = vmatpush1.msra.mxu0 0.0
        %1335 = vmatprep.subr.mxu0 0.0
        %1336 = vmatpush1.msra.mxu0 0.0
        %1337 = vmatprep.subr.mxu0 0.0
        %1338 = vmatpush1.msra.mxu0 0.0
        %v1339 = vand.u32 %v341, 4294901760
        %v1340 = vsub.f32 %v341, %v1339
        %1341 = vmatprep.subr.mxu0 %v1340
        %v1342 = vand.u32 %v340, 4294901760
        %v1343 = vsub.f32 %v340, %v1342
        %1344 = vmatpush1.msra.mxu0 %v1343
        %v1345 = vand.u32 %v339, 4294901760
        %v1346 = vsub.f32 %v339, %v1345
        %1347 = vmatprep.subr.mxu0 %v1346
        %v1348 = vand.u32 %v338, 4294901760
        %v1349 = vsub.f32 %v338, %v1348
        %1350 = vmatpush1.msra.mxu0 %v1349
        %v1351 = vand.u32 %v337, 4294901760
        %v1352 = vsub.f32 %v337, %v1351
        %1353 = vmatprep.subr.mxu0 %v1352
        %v1354 = vand.u32 %v336, 4294901760
        %v1355 = vsub.f32 %v336, %v1354
        %1356 = vmatpush1.msra.mxu0 %v1355
        %v1357 = vand.u32 %v335, 4294901760
        %v1358 = vsub.f32 %v335, %v1357
        %1359 = vmatprep.subr.mxu0 %v1358
        %v1360 = vand.u32 %v334, 4294901760
        %v1361 = vsub.f32 %v334, %v1360
        %1362 = vmatpush1.msra.mxu0 %v1361
        %1363 = vmatprep.subr.mxu0 0.0
        %1364 = vmatpush2.msra.mxu0 0.0
        %1365 = vmatprep.subr.mxu0 0.0
        %1366 = vmatpush2.msra.mxu0 0.0
        %1367 = vmatprep.subr.mxu0 0.0
        %1368 = vmatpush2.msra.mxu0 0.0
        %1369 = vmatprep.subr.mxu0 0.0
        %1370 = vmatpush2.msra.mxu0 0.0
        %1371 = vmatprep.subr.mxu0 0.0
        %1372 = vmatpush2.msra.mxu0 0.0
        %1373 = vmatprep.subr.mxu0 0.0
        %1374 = vmatpush2.msra.mxu0 0.0
        %1375 = vmatprep.subr.mxu0 0.0
        %1376 = vmatpush2.msra.mxu0 0.0
        %1377 = vmatprep.subr.mxu0 0.0
        %1378 = vmatpush2.msra.mxu0 0.0
        %1379 = vmatprep.subr.mxu0 0.0
        %1380 = vmatpush2.msra.mxu0 0.0
        %1381 = vmatprep.subr.mxu0 0.0
        %1382 = vmatpush2.msra.mxu0 0.0
        %1383 = vmatprep.subr.mxu0 0.0
        %1384 = vmatpush2.msra.mxu0 0.0
        %1385 = vmatprep.subr.mxu0 0.0
        %1386 = vmatpush2.msra.mxu0 0.0
        %1387 = vmatprep.subr.mxu0 0.0
        %1388 = vmatpush2.msra.mxu0 0.0
        %1389 = vmatprep.subr.mxu0 0.0
        %1390 = vmatpush2.msra.mxu0 0.0
        %1391 = vmatprep.subr.mxu0 0.0
        %1392 = vmatpush2.msra.mxu0 0.0
        %1393 = vmatprep.subr.mxu0 0.0
        %1394 = vmatpush2.msra.mxu0 0.0
        %1395 = vmatprep.mubr.f32.mxu0 0.0
        %v1396 = vand.u32 %v1054, 4294901760
        %v1397 = vsub.f32 %v1054, %v1396
        %1398 = vmatmul.mubr.f32.gmra.mxu0 %v1397
        %v1399 = vpop.f32.mrf.mxu0
        %v1400 = vadd.f32 %v1290, %v1399
        %v1401 = vpop.f32.mrf.mxu0
        %v1402 = vadd.f32 %v1292, %v1401
        %1403 = vmatprep.mubr.f32.mxu0 0.0
        %v1404 = vand.u32 %v1057, 4294901760
        %v1405 = vsub.f32 %v1057, %v1404
        %1406 = vmatmul.mubr.f32.gmra.mxu0 %v1405
        %v1407 = vpop.f32.mrf.mxu0
        %v1408 = vadd.f32 %v1297, %v1407
        %v1409 = vpop.f32.mrf.mxu0
        %v1410 = vadd.f32 %v1299, %v1409
        %1411 = vmatprep.mubr.f32.mxu0 0.0
        %v1412 = vand.u32 %v1060, 4294901760
        %v1413 = vsub.f32 %v1060, %v1412
        %1414 = vmatmul.mubr.f32.gmra.mxu0 %v1413
        %v1415 = vpop.f32.mrf.mxu0
        %v1416 = vadd.f32 %v1304, %v1415
        %v1417 = vpop.f32.mrf.mxu0
        %v1418 = vadd.f32 %v1306, %v1417
        %1419 = vmatprep.mubr.f32.mxu0 0.0
        %v1420 = vand.u32 %v1063, 4294901760
        %v1421 = vsub.f32 %v1063, %v1420
        %1422 = vmatmul.mubr.f32.gmra.mxu0 %v1421
        %v1423 = vpop.f32.mrf.mxu0
        %v1424 = vadd.f32 %v1311, %v1423
        %v1425 = vpop.f32.mrf.mxu0
        %v1426 = vadd.f32 %v1313, %v1425
        %1427 = vdwg.mxu0
        %1428 = vmatprep.subr.mxu0 0.0
        %1429 = vmatpush1.msra.mxu0 0.0
        %1430 = vmatprep.subr.mxu0 0.0
        %1431 = vmatpush1.msra.mxu0 0.0
        %1432 = vmatprep.subr.mxu0 0.0
        %1433 = vmatpush1.msra.mxu0 0.0
        %1434 = vmatprep.subr.mxu0 0.0
        %1435 = vmatpush1.msra.mxu0 0.0
        %1436 = vmatprep.subr.mxu0 0.0
        %1437 = vmatpush1.msra.mxu0 0.0
        %1438 = vmatprep.subr.mxu0 0.0
        %1439 = vmatpush1.msra.mxu0 0.0
        %1440 = vmatprep.subr.mxu0 0.0
        %1441 = vmatpush1.msra.mxu0 0.0
        %1442 = vmatprep.subr.mxu0 0.0
        %1443 = vmatpush1.msra.mxu0 0.0
        %1444 = vmatprep.subr.mxu0 0.0
        %1445 = vmatpush1.msra.mxu0 0.0
        %1446 = vmatprep.subr.mxu0 0.0
        %1447 = vmatpush1.msra.mxu0 0.0
        %1448 = vmatprep.subr.mxu0 0.0
        %1449 = vmatpush1.msra.mxu0 0.0
        %1450 = vmatprep.subr.mxu0 0.0
        %1451 = vmatpush1.msra.mxu0 0.0
        %v1452 = vand.u32 %v341, 4294901760
        %1453 = vmatprep.subr.mxu0 %v1452
        %v1454 = vand.u32 %v340, 4294901760
        %1455 = vmatpush1.msra.mxu0 %v1454
        %v1456 = vand.u32 %v339, 4294901760
        %1457 = vmatprep.subr.mxu0 %v1456
        %v1458 = vand.u32 %v338, 4294901760
        %1459 = vmatpush1.msra.mxu0 %v1458
        %v1460 = vand.u32 %v337, 4294901760
        %1461 = vmatprep.subr.mxu0 %v1460
        %v1462 = vand.u32 %v336, 4294901760
        %1463 = vmatpush1.msra.mxu0 %v1462
        %v1464 = vand.u32 %v335, 4294901760
        %1465 = vmatprep.subr.mxu0 %v1464
        %v1466 = vand.u32 %v334, 4294901760
        %1467 = vmatpush1.msra.mxu0 %v1466
        %1468 = vmatprep.subr.mxu0 0.0
        %1469 = vmatpush2.msra.mxu0 0.0
        %1470 = vmatprep.subr.mxu0 0.0
        %1471 = vmatpush2.msra.mxu0 0.0
        %1472 = vmatprep.subr.mxu0 0.0
        %1473 = vmatpush2.msra.mxu0 0.0
        %1474 = vmatprep.subr.mxu0 0.0
        %1475 = vmatpush2.msra.mxu0 0.0
        %1476 = vmatprep.subr.mxu0 0.0
        %1477 = vmatpush2.msra.mxu0 0.0
        %1478 = vmatprep.subr.mxu0 0.0
        %1479 = vmatpush2.msra.mxu0 0.0
        %1480 = vmatprep.subr.mxu0 0.0
        %1481 = vmatpush2.msra.mxu0 0.0
        %1482 = vmatprep.subr.mxu0 0.0
        %1483 = vmatpush2.msra.mxu0 0.0
        %1484 = vmatprep.subr.mxu0 0.0
        %1485 = vmatpush2.msra.mxu0 0.0
        %1486 = vmatprep.subr.mxu0 0.0
        %1487 = vmatpush2.msra.mxu0 0.0
        %1488 = vmatprep.subr.mxu0 0.0
        %1489 = vmatpush2.msra.mxu0 0.0
        %1490 = vmatprep.subr.mxu0 0.0
        %1491 = vmatpush2.msra.mxu0 0.0
        %1492 = vmatprep.subr.mxu0 0.0
        %1493 = vmatpush2.msra.mxu0 0.0
        %1494 = vmatprep.subr.mxu0 0.0
        %1495 = vmatpush2.msra.mxu0 0.0
        %1496 = vmatprep.subr.mxu0 0.0
        %1497 = vmatpush2.msra.mxu0 0.0
        %1498 = vmatprep.subr.mxu0 0.0
        %1499 = vmatpush2.msra.mxu0 0.0
        %1500 = vmatprep.mubr.f32.mxu0 0.0
        %v1501 = vand.u32 %v1054, 4294901760
        %v1502 = vsub.f32 %v1054, %v1501
        %v1503 = vand.u32 %v1502, 4294901760
        %1504 = vmatmul.mubr.f32.gmra.mxu0 %v1503
        %v1505 = vpop.f32.mrf.mxu0
        %v1506 = vadd.f32 %v1400, %v1505
        %v1507 = vpop.f32.mrf.mxu0
        %v1508 = vadd.f32 %v1402, %v1507
        %1509 = vmatprep.mubr.f32.mxu0 0.0
        %v1510 = vand.u32 %v1057, 4294901760
        %v1511 = vsub.f32 %v1057, %v1510
        %v1512 = vand.u32 %v1511, 4294901760
        %1513 = vmatmul.mubr.f32.gmra.mxu0 %v1512
        %v1514 = vpop.f32.mrf.mxu0
        %v1515 = vadd.f32 %v1408, %v1514
        %v1516 = vpop.f32.mrf.mxu0
        %v1517 = vadd.f32 %v1410, %v1516
        %1518 = vmatprep.mubr.f32.mxu0 0.0
        %v1519 = vand.u32 %v1060, 4294901760
        %v1520 = vsub.f32 %v1060, %v1519
        %v1521 = vand.u32 %v1520, 4294901760
        %1522 = vmatmul.mubr.f32.gmra.mxu0 %v1521
        %v1523 = vpop.f32.mrf.mxu0
        %v1524 = vadd.f32 %v1416, %v1523
        %v1525 = vpop.f32.mrf.mxu0
        %v1526 = vadd.f32 %v1418, %v1525
        %1527 = vmatprep.mubr.f32.mxu0 0.0
        %v1528 = vand.u32 %v1063, 4294901760
        %v1529 = vsub.f32 %v1063, %v1528
        %v1530 = vand.u32 %v1529, 4294901760
        %1531 = vmatmul.mubr.f32.gmra.mxu0 %v1530
        %v1532 = vpop.f32.mrf.mxu0
        %v1533 = vadd.f32 %v1424, %v1532
        %v1534 = vpop.f32.mrf.mxu0
        %v1535 = vadd.f32 %v1426, %v1534
        %1536 = vdwg.mxu0
        %1537 = vmatprep.subr.mxu0 0.0
        %1538 = vmatpush1.msra.mxu0 0.0
        %1539 = vmatprep.subr.mxu0 0.0
        %1540 = vmatpush1.msra.mxu0 0.0
        %1541 = vmatprep.subr.mxu0 0.0
        %1542 = vmatpush1.msra.mxu0 0.0
        %1543 = vmatprep.subr.mxu0 0.0
        %1544 = vmatpush1.msra.mxu0 0.0
        %1545 = vmatprep.subr.mxu0 0.0
        %1546 = vmatpush1.msra.mxu0 0.0
        %1547 = vmatprep.subr.mxu0 0.0
        %1548 = vmatpush1.msra.mxu0 0.0
        %1549 = vmatprep.subr.mxu0 0.0
        %1550 = vmatpush1.msra.mxu0 0.0
        %1551 = vmatprep.subr.mxu0 0.0
        %1552 = vmatpush1.msra.mxu0 0.0
        %1553 = vmatprep.subr.mxu0 0.0
        %1554 = vmatpush1.msra.mxu0 0.0
        %1555 = vmatprep.subr.mxu0 0.0
        %1556 = vmatpush1.msra.mxu0 0.0
        %1557 = vmatprep.subr.mxu0 0.0
        %1558 = vmatpush1.msra.mxu0 0.0
        %1559 = vmatprep.subr.mxu0 0.0
        %1560 = vmatpush1.msra.mxu0 0.0
        %v1561 = vand.u32 %v341, 4294901760
        %v1562 = vsub.f32 %v341, %v1561
        %v1563 = vand.u32 %v1562, 4294901760
        %1564 = vmatprep.subr.mxu0 %v1563
        %v1565 = vand.u32 %v340, 4294901760
        %v1566 = vsub.f32 %v340, %v1565
        %v1567 = vand.u32 %v1566, 4294901760
        %1568 = vmatpush1.msra.mxu0 %v1567
        %v1569 = vand.u32 %v339, 4294901760
        %v1570 = vsub.f32 %v339, %v1569
        %v1571 = vand.u32 %v1570, 4294901760
        %1572 = vmatprep.subr.mxu0 %v1571
        %v1573 = vand.u32 %v338, 4294901760
        %v1574 = vsub.f32 %v338, %v1573
        %v1575 = vand.u32 %v1574, 4294901760
        %1576 = vmatpush1.msra.mxu0 %v1575
        %v1577 = vand.u32 %v337, 4294901760
        %v1578 = vsub.f32 %v337, %v1577
        %v1579 = vand.u32 %v1578, 4294901760
        %1580 = vmatprep.subr.mxu0 %v1579
        %v1581 = vand.u32 %v336, 4294901760
        %v1582 = vsub.f32 %v336, %v1581
        %v1583 = vand.u32 %v1582, 4294901760
        %1584 = vmatpush1.msra.mxu0 %v1583
        %v1585 = vand.u32 %v335, 4294901760
        %v1586 = vsub.f32 %v335, %v1585
        %v1587 = vand.u32 %v1586, 4294901760
        %1588 = vmatprep.subr.mxu0 %v1587
        %v1589 = vand.u32 %v334, 4294901760
        %v1590 = vsub.f32 %v334, %v1589
        %v1591 = vand.u32 %v1590, 4294901760
        %1592 = vmatpush1.msra.mxu0 %v1591
        %1593 = vmatprep.subr.mxu0 0.0
        %1594 = vmatpush2.msra.mxu0 0.0
        %1595 = vmatprep.subr.mxu0 0.0
        %1596 = vmatpush2.msra.mxu0 0.0
        %1597 = vmatprep.subr.mxu0 0.0
        %1598 = vmatpush2.msra.mxu0 0.0
        %1599 = vmatprep.subr.mxu0 0.0
        %1600 = vmatpush2.msra.mxu0 0.0
        %1601 = vmatprep.subr.mxu0 0.0
        %1602 = vmatpush2.msra.mxu0 0.0
        %1603 = vmatprep.subr.mxu0 0.0
        %1604 = vmatpush2.msra.mxu0 0.0
        %1605 = vmatprep.subr.mxu0 0.0
        %1606 = vmatpush2.msra.mxu0 0.0
        %1607 = vmatprep.subr.mxu0 0.0
        %1608 = vmatpush2.msra.mxu0 0.0
        %1609 = vmatprep.subr.mxu0 0.0
        %1610 = vmatpush2.msra.mxu0 0.0
        %1611 = vmatprep.subr.mxu0 0.0
        %1612 = vmatpush2.msra.mxu0 0.0
        %1613 = vmatprep.subr.mxu0 0.0
        %1614 = vmatpush2.msra.mxu0 0.0
        %1615 = vmatprep.subr.mxu0 0.0
        %1616 = vmatpush2.msra.mxu0 0.0
        %1617 = vmatprep.subr.mxu0 0.0
        %1618 = vmatpush2.msra.mxu0 0.0
        %1619 = vmatprep.subr.mxu0 0.0
        %1620 = vmatpush2.msra.mxu0 0.0
        %1621 = vmatprep.subr.mxu0 0.0
        %1622 = vmatpush2.msra.mxu0 0.0
        %1623 = vmatprep.subr.mxu0 0.0
        %1624 = vmatpush2.msra.mxu0 0.0
        %1625 = vmatprep.mubr.f32.mxu0 0.0
        %v1626 = vand.u32 %v1054, 4294901760
        %1627 = vmatmul.mubr.f32.gmra.mxu0 %v1626
        %v1628 = vpop.f32.mrf.mxu0
        %v1629 = vadd.f32 %v1506, %v1628
        %v1630 = vpop.f32.mrf.mxu0
        %v1631 = vadd.f32 %v1508, %v1630
        %1632 = vmatprep.mubr.f32.mxu0 0.0
        %v1633 = vand.u32 %v1057, 4294901760
        %1634 = vmatmul.mubr.f32.gmra.mxu0 %v1633
        %v1635 = vpop.f32.mrf.mxu0
        %v1636 = vadd.f32 %v1515, %v1635
        %v1637 = vpop.f32.mrf.mxu0
        %v1638 = vadd.f32 %v1517, %v1637
        %1639 = vmatprep.mubr.f32.mxu0 0.0
        %v1640 = vand.u32 %v1060, 4294901760
        %1641 = vmatmul.mubr.f32.gmra.mxu0 %v1640
        %v1642 = vpop.f32.mrf.mxu0
        %v1643 = vadd.f32 %v1524, %v1642
        %v1644 = vpop.f32.mrf.mxu0
        %v1645 = vadd.f32 %v1526, %v1644
        %1646 = vmatprep.mubr.f32.mxu0 0.0
        %v1647 = vand.u32 %v1063, 4294901760
        %1648 = vmatmul.mubr.f32.gmra.mxu0 %v1647
        %v1649 = vpop.f32.mrf.mxu0
        %v1650 = vadd.f32 %v1533, %v1649
        %v1651 = vpop.f32.mrf.mxu0
        %v1652 = vadd.f32 %v1535, %v1651
        %1653 = vdwg.mxu0
        %1654 = vmatprep.subr.mxu0 0.0
        %1655 = vmatpush1.msra.mxu0 0.0
        %1656 = vmatprep.subr.mxu0 0.0
        %1657 = vmatpush1.msra.mxu0 0.0
        %1658 = vmatprep.subr.mxu0 0.0
        %1659 = vmatpush1.msra.mxu0 0.0
        %1660 = vmatprep.subr.mxu0 0.0
        %1661 = vmatpush1.msra.mxu0 0.0
        %1662 = vmatprep.subr.mxu0 0.0
        %1663 = vmatpush1.msra.mxu0 0.0
        %1664 = vmatprep.subr.mxu0 0.0
        %1665 = vmatpush1.msra.mxu0 0.0
        %1666 = vmatprep.subr.mxu0 0.0
        %1667 = vmatpush1.msra.mxu0 0.0
        %1668 = vmatprep.subr.mxu0 0.0
        %1669 = vmatpush1.msra.mxu0 0.0
        %1670 = vmatprep.subr.mxu0 0.0
        %1671 = vmatpush1.msra.mxu0 0.0
        %1672 = vmatprep.subr.mxu0 0.0
        %1673 = vmatpush1.msra.mxu0 0.0
        %1674 = vmatprep.subr.mxu0 0.0
        %1675 = vmatpush1.msra.mxu0 0.0
        %1676 = vmatprep.subr.mxu0 0.0
        %1677 = vmatpush1.msra.mxu0 0.0
        %v1678 = vand.u32 %v341, 4294901760
        %1679 = vmatprep.subr.mxu0 %v1678
        %v1680 = vand.u32 %v340, 4294901760
        %1681 = vmatpush1.msra.mxu0 %v1680
        %v1682 = vand.u32 %v339, 4294901760
        %1683 = vmatprep.subr.mxu0 %v1682
        %v1684 = vand.u32 %v338, 4294901760
        %1685 = vmatpush1.msra.mxu0 %v1684
        %v1686 = vand.u32 %v337, 4294901760
        %1687 = vmatprep.subr.mxu0 %v1686
        %v1688 = vand.u32 %v336, 4294901760
        %1689 = vmatpush1.msra.mxu0 %v1688
        %v1690 = vand.u32 %v335, 4294901760
        %1691 = vmatprep.subr.mxu0 %v1690
        %v1692 = vand.u32 %v334, 4294901760
        %1693 = vmatpush1.msra.mxu0 %v1692
        %1694 = vmatprep.subr.mxu0 0.0
        %1695 = vmatpush2.msra.mxu0 0.0
        %1696 = vmatprep.subr.mxu0 0.0
        %1697 = vmatpush2.msra.mxu0 0.0
        %1698 = vmatprep.subr.mxu0 0.0
        %1699 = vmatpush2.msra.mxu0 0.0
        %1700 = vmatprep.subr.mxu0 0.0
        %1701 = vmatpush2.msra.mxu0 0.0
        %1702 = vmatprep.subr.mxu0 0.0
        %1703 = vmatpush2.msra.mxu0 0.0
        %1704 = vmatprep.subr.mxu0 0.0
        %1705 = vmatpush2.msra.mxu0 0.0
        %1706 = vmatprep.subr.mxu0 0.0
        %1707 = vmatpush2.msra.mxu0 0.0
        %1708 = vmatprep.subr.mxu0 0.0
        %1709 = vmatpush2.msra.mxu0 0.0
        %1710 = vmatprep.subr.mxu0 0.0
        %1711 = vmatpush2.msra.mxu0 0.0
        %1712 = vmatprep.subr.mxu0 0.0
        %1713 = vmatpush2.msra.mxu0 0.0
        %1714 = vmatprep.subr.mxu0 0.0
        %1715 = vmatpush2.msra.mxu0 0.0
        %1716 = vmatprep.subr.mxu0 0.0
        %1717 = vmatpush2.msra.mxu0 0.0
        %1718 = vmatprep.subr.mxu0 0.0
        %1719 = vmatpush2.msra.mxu0 0.0
        %1720 = vmatprep.subr.mxu0 0.0
        %1721 = vmatpush2.msra.mxu0 0.0
        %1722 = vmatprep.subr.mxu0 0.0
        %1723 = vmatpush2.msra.mxu0 0.0
        %1724 = vmatprep.subr.mxu0 0.0
        %1725 = vmatpush2.msra.mxu0 0.0
        %1726 = vmatprep.mubr.f32.mxu0 0.0
        %v1727 = vand.u32 %v1054, 4294901760
        %1728 = vmatmul.mubr.f32.gmra.mxu0 %v1727
        %v1729 = vpop.f32.mrf.mxu0
        %v1730 = vadd.f32 %v1629, %v1729
        %v1731 = vpop.f32.mrf.mxu0
        %v1732 = vadd.f32 %v1631, %v1731
        %1733 = vmatprep.mubr.f32.mxu0 0.0
        %v1734 = vand.u32 %v1057, 4294901760
        %1735 = vmatmul.mubr.f32.gmra.mxu0 %v1734
        %v1736 = vpop.f32.mrf.mxu0
        %v1737 = vadd.f32 %v1636, %v1736
        %v1738 = vpop.f32.mrf.mxu0
        %v1739 = vadd.f32 %v1638, %v1738
        %1740 = vmatprep.mubr.f32.mxu0 0.0
        %v1741 = vand.u32 %v1060, 4294901760
        %1742 = vmatmul.mubr.f32.gmra.mxu0 %v1741
        %v1743 = vpop.f32.mrf.mxu0
        %v1744 = vadd.f32 %v1643, %v1743
        %v1745 = vpop.f32.mrf.mxu0
        %v1746 = vadd.f32 %v1645, %v1745
        %1747 = vmatprep.mubr.f32.mxu0 0.0
        %v1748 = vand.u32 %v1063, 4294901760
        %1749 = vmatmul.mubr.f32.gmra.mxu0 %v1748
        %v1750 = vpop.f32.mrf.mxu0
        %v1751 = vadd.f32 %v1650, %v1750
        %v1752 = vpop.f32.mrf.mxu0
        %v1753 = vadd.f32 %v1652, %v1752
        %1754 = vdwg.mxu0
        %1756 = vset.pattern.permute.xlu0 0
        %1757 = vperm.xlu0 %1756, %v322
        %v1758 = vpop.permute.xlu0 %1757
        %1761 = vset.pattern.permute.xlu0 0
        %1762 = vperm.xlu0 %1761, %v323
        %v1763 = vpop.permute.xlu0 %1762
        %1766 = vset.pattern.permute.xlu0 0
        %1767 = vperm.xlu0 %1766, %v324
        %v1768 = vpop.permute.xlu0 %1767
        %1771 = vset.pattern.permute.xlu0 0
        %1772 = vperm.xlu0 %1771, %v325
        %v1773 = vpop.permute.xlu0 %1772
        %v1775 = vadd.f32 %v1730, %v1758
        %v1776 = vadd.f32 %v1732, %v1758
        %v1777 = vadd.f32 %v1737, %v1763
        %v1778 = vadd.f32 %v1739, %v1763
        %v1779 = vadd.f32 %v1744, %v1768
        %v1780 = vadd.f32 %v1746, %v1768
        %v1781 = vadd.f32 %v1751, %v1773
        %v1782 = vadd.f32 %v1753, %v1773
        %v1783 = vadd.f32 %v1775, %v334
        %v1784 = vadd.f32 %v1776, %v335
        %v1785 = vadd.f32 %v1777, %v336
        %v1786 = vadd.f32 %v1778, %v337
        %v1787 = vadd.f32 %v1779, %v338
        %v1788 = vadd.f32 %v1780, %v339
        %v1789 = vadd.f32 %v1781, %v340
        %v1790 = vadd.f32 %v1782, %v341
        %v1791 = vmax.f32 %v1783, 0.0
        %v1792 = vmax.f32 %v1784, 0.0
        %v1793 = vmax.f32 %v1785, 0.0
        %v1794 = vmax.f32 %v1786, 0.0
        %v1795 = vmax.f32 %v1787, 0.0
        %v1796 = vmax.f32 %v1788, 0.0
        %v1797 = vmax.f32 %v1789, 0.0
        %v1798 = vmax.f32 %v1790, 0.0
        %1799 = vst [vmem:[%s318] sm:$0xff] %v1791
        %1800 = vst [vmem:[%s318 + $0x8] sm:$0xff] %v1792
        %1801 = vst [vmem:[%s318 + $0x10] sm:$0xff] %v1793
        %1802 = vst [vmem:[%s318 + $0x18] sm:$0xff] %v1794
        %1803 = vst [vmem:[%s318 + $0x20] sm:$0xff] %v1795
        %1804 = vst [vmem:[%s318 + $0x28] sm:$0xff] %v1796
        %1805 = vst [vmem:[%s318 + $0x30] sm:$0xff] %v1797
        %1806 = vst [vmem:[%s318 + $0x38] sm:$0xff] %v1798
        %s1807 = sand.u32 %s166, 1
        %s1808 = scalar_lea.sflag [#allocation4], %s1807
        %s1809 = sand.u32 %s166, 1
        %s1810 = smul.addr %s1809, 64
        %s1811 = scalar_lea.vmem [#allocation8], %s1810
        // Predicated region
        $region53: #{tpu_custom_call.1} parent=39 // pred_check
          %p1812 = pneg %p176
        $region54: #{tpu_custom_call.1} parent=39 // pred_check_branch
          %1814 = sbr.rel (%p1812) target = $region56
        $region55: #{tpu_custom_call.1} parent=39 // pred_region
          %s1815 = smul.u32 2, %s30
          %s1817 = ssub.s32 1024, 1024
          %1818 = vsyncadd %s1808, %s1817
          %s1819 = smul.addr %s29, 8
          %s1820 = sadd.s32 %s1815, %s1819
          %s1821 = smul.addr %s1820, 128
          %s1822 = scalar_lea.hbm %s5, %s1821
          %s1823 = sshll.u32 %s1811, 4
          %s1824 = int_to_ptr.vmem [resolvable:$true] %s1823
          %1829 = dma.vmem_to_hbm [thread:$0]  %s1824, 1024, %s1822, %s1808, 256, 256, 16
        $region56: #{tpu_custom_call.1} parent=39 // pred_fallthru
          _
      $region40: #{tpu_custom_call.1} parent=5 // pred_fallthru
        _
      %p1830 = scmp.le.s32.totalorder 2, %s20
      // Predicated region
      $region57: #{tpu_custom_call.1} parent=5 // pred_check
        %p1831 = pneg %p1830
      $region58: #{tpu_custom_call.1} parent=5 // pred_check_branch
        %1833 = sbr.rel (%p1831) target = $region60
      $region59: #{tpu_custom_call.1} parent=5 // pred_region
        %s1834 = ssub.s32 %s20, 2
        // Predicated region
        $region61: #{tpu_custom_call.1} parent=59 // pred_check
          %p1835 = pneg %p182
        $region62: #{tpu_custom_call.1} parent=59 // pred_check_branch
          %1837 = sbr.rel (%p1835) target = $region64
        $region63: #{tpu_custom_call.1} parent=59 // pred_region
          %s1838 = sand.u32 %s167, 1
          %s1839 = scalar_lea.sflag [#allocation4], %s1838
          %s1840 = sand.u32 %s167, 1
          %s1841 = smul.addr %s1840, 64
          %s1842 = scalar_lea.vmem [#allocation8], %s1841
          %1843 = dma.done %s1839, 1024
        $region64: #{tpu_custom_call.1} parent=59 // pred_fallthru
          _
      $region60: #{tpu_custom_call.1} parent=5 // pred_fallthru
        _
    $region6: #{tpu_custom_call.1} parent=1 // loop_footer
      %s24 = sadd.s32 1, %s20
    $region7: #{tpu_custom_call.1} parent=1 // loop_footer_branch
      %19 = sbr.rel target = $region3
    $region8: #{tpu_custom_call.1} parent=1 // loop_exit
      _
    %1844 = vsyncpa [#allocation3], 1
    %s1845 = scalar_lea.sflag [#allocation3], 1
    %1846 = vsyncpa %s1845, 1
    %1847 = vsyncpa [#allocation6], 1
    %s1848 = scalar_lea.sflag [#allocation6], 1
    %1849 = vsyncpa %s1848, 1
    %1850 = vsyncpa [#allocation4], 1
    %s1851 = scalar_lea.sflag [#allocation4], 1
    %1852 = vsyncpa %s1851, 1

</llo_original>
